<compile_context>
chip_gen: v7x
topology: tpu7x:2x2x1
jax: 0.10.0
libtpu: 0.0.40
codegen_flags: <defaults>
</compile_context>

<pallas_src>
from functools import partial

import jax
import jax.numpy as jnp
from jax.experimental import pallas as pl
from jax.experimental.pallas import tpu as pltpu

H1 = 512
H2 = 256
H3 = 1
H3_PAD = 8  # sublane-padded row count of the final (1 x 256) weight


def _round_up(a, m):
    return ((a + m - 1) // m) * m


def _choose_bt(batch, max_tile):
    """Pick a batch tile (multiple of 128): minimize padding, then prefer
    >=2 grid steps (v7x has 2 TensorCores), then prefer the largest tile."""
    cands = [c for c in (128, 256, 512, 1024) if c <= max(int(max_tile), 128)]
    best, best_key = None, None
    for c in cands:
        bp = _round_up(batch, c)
        steps = bp // c
        key = (bp, 0 if steps >= 2 else 1, -c)
        if best_key is None or key < best_key:
            best, best_key = c, key
    return best


def discriminator_kernel(x_ref, w1_ref, b1_ref, w2_ref, b2_ref,
                         w3_ref, b3_ref, o_ref):
    """Fused 3-layer MLP on one batch tile, transposed layout.

    x_ref:  (D,  bt)   bf16/f32   (x^T tile; batch on lanes)
    w1_ref: (H1, D)    bf16/f32   resident
    b1_ref: (H1, 1)    f32        resident
    w2_ref: (H2, H1)   bf16/f32   resident
    b2_ref: (H2, 1)    f32        resident
    w3_ref: (H3_PAD, H2) bf16/f32 resident (rows 1.. are zero)
    b3_ref: (H3_PAD, 1)  f32      resident
    o_ref:  (1,  bt)   f32        lane-dense output row
    """
    mm_dtype = x_ref.dtype

    # Layer 1: (H1, D) @ (D, bt) -> f32 (H1, bt); bias + LeakyReLU in f32,
    # re-materialize as bf16 for the next MXU op.
    h = jnp.dot(w1_ref[...], x_ref[...],
                preferred_element_type=jnp.float32) + b1_ref[...]
    h = jnp.maximum(h, 0.2 * h).astype(mm_dtype)

    # Layer 2: (H2, H1) @ (H1, bt)
    h = jnp.dot(w2_ref[...], h,
                preferred_element_type=jnp.float32) + b2_ref[...]
    h = jnp.maximum(h, 0.2 * h).astype(mm_dtype)

    # Layer 3: (H3_PAD, H2) @ (H2, bt); only row 0 is real.
    out = jnp.dot(w3_ref[...], h,
                  preferred_element_type=jnp.float32) + b3_ref[...]
    o_ref[...] = out[0:1, :].astype(o_ref.dtype)


def init_params(key, input_dim):
    """Deterministic synthetic parameters in native PyTorch layout (out, in)."""
    ks = jax.random.split(key, 6)
    s1 = 1.0 / jnp.sqrt(input_dim)
    s2 = 1.0 / jnp.sqrt(H1)
    s3 = 1.0 / jnp.sqrt(H2)
    w1 = jax.random.uniform(ks[0], (H1, input_dim), jnp.float32, -s1, s1)
    b1 = jax.random.uniform(ks[1], (H1,), jnp.float32, -s1, s1)
    w2 = jax.random.uniform(ks[2], (H2, H1), jnp.float32, -s2, s2)
    b2 = jax.random.uniform(ks[3], (H2,), jnp.float32, -s2, s2)
    w3 = jax.random.uniform(ks[4], (H3, H2), jnp.float32, -s3, s3)
    b3 = jax.random.uniform(ks[5], (H3,), jnp.float32, -s3, s3)
    return (w1, b1, w2, b2, w3, b3)


def prepare_params(params, *, use_bf16=True):
    """One-time parameter prep: bf16 casts, column-vector biases, padded w3/b3."""
    w1, b1, w2, b2, w3, b3 = params
    mm_dtype = jnp.bfloat16 if use_bf16 else jnp.float32
    w3p = jnp.zeros((H3_PAD, H2), jnp.float32).at[:H3].set(w3.astype(jnp.float32))
    b3p = jnp.zeros((H3_PAD, 1), jnp.float32).at[:H3, 0].set(
        b3.reshape(-1).astype(jnp.float32))
    return (w1.astype(mm_dtype),
            b1.reshape(H1, 1).astype(jnp.float32),
            w2.astype(mm_dtype),
            b2.reshape(H2, 1).astype(jnp.float32),
            w3p.astype(mm_dtype),
            b3p)


@partial(jax.jit, static_argnames=("batch_tile",))
def discriminator_forward(x, prepared, *, batch_tile=1024):
    """x: (B, input_dim) float32.  prepared: output of prepare_params.
    Returns (B, 1) float32."""
    w1q, b1f, w2q, b2f, w3q, b3f = prepared
    B, D = x.shape
    mm_dtype = w1q.dtype

    bt = _choose_bt(B, batch_tile)
    Bp = _round_up(B, bt)

    # Transposed, casted input: (D, Bp); batch on the lane axis.
    xT = jnp.swapaxes(x, 0, 1).astype(mm_dtype)
    if Bp != B:
        xT = jnp.pad(xT, ((0, 0), (0, Bp - B)))

    grid = (Bp // bt,)
    rep = lambda i: (0, 0)  # resident weight/bias blocks

    w_bytes = jnp.dtype(mm_dtype).itemsize
    flops = 2 * Bp * (D * H1 + H1 * H2 + H2 * H3_PAD)
    bytes_accessed = (
        Bp * D * w_bytes                                   # x^T
        + (D * H1 + H1 * H2 + H2 * H3_PAD) * w_bytes       # weights
        + (H1 + H2 + H3_PAD) * 4                           # biases (f32)
        + Bp * 4                                           # output (f32 row)
    )

    out = pl.pallas_call(
        discriminator_kernel,
        out_shape=jax.ShapeDtypeStruct((1, Bp), jnp.float32),
        grid_spec=pltpu.PrefetchScalarGridSpec(
            num_scalar_prefetch=0,
            grid=grid,
            in_specs=[
                pl.BlockSpec((D, bt), lambda i: (0, i)),   # x^T tile
                pl.BlockSpec((H1, D), rep),                # w1 (resident)
                pl.BlockSpec((H1, 1), rep),                # b1
                pl.BlockSpec((H2, H1), rep),               # w2
                pl.BlockSpec((H2, 1), rep),                # b2
                pl.BlockSpec((H3_PAD, H2), rep),           # w3 (row-padded)
                pl.BlockSpec((H3_PAD, 1), rep),            # b3 (row-padded)
            ],
            out_specs=pl.BlockSpec((1, bt), lambda i: (0, i)),
        ),
        compiler_params=pltpu.CompilerParams(
            dimension_semantics=("parallel",),
            vmem_limit_bytes=32 * 1024 * 1024),
        cost_estimate=pl.CostEstimate(
            flops=flops, transcendentals=0, bytes_accessed=bytes_accessed),
    )(xT, w1q, b1f, w2q, b2f, w3q, b3f)

    # Drop batch padding, restore (B, 1).
    return out[0, :B].reshape(B, 1)


def reference_forward(x, params, *, use_bf16=True):
    """Plain-JAX reference replicating the kernel's mixed-precision math."""
    w1, b1, w2, b2, w3, b3 = params
    cast = (lambda a: a.astype(jnp.bfloat16)) if use_bf16 else (lambda a: a)
    h = jnp.dot(cast(x), cast(w1).T, preferred_element_type=jnp.float32) + b1
    h = jnp.maximum(h, 0.2 * h)
    h = jnp.dot(cast(h), cast(w2).T, preferred_element_type=jnp.float32) + b2
    h = jnp.maximum(h, 0.2 * h)
    return jnp.dot(cast(h), cast(w3).T, preferred_element_type=jnp.float32) + b3


if __name__ == "__main__":
    key = jax.random.PRNGKey(0)
    k_x, k_p = jax.random.split(key)

    batch = 512        # -> bt=256, 2 grid steps (keeps both v7x TCs busy)
    input_dim = 64
    x = jax.random.normal(k_x, (batch, input_dim), dtype=jnp.float32)

    params = init_params(k_p, input_dim)
    prepared = prepare_params(params, use_bf16=True)

    out = discriminator_forward(x, prepared, batch_tile=1024)
    out = jax.block_until_ready(out)

    ref = reference_forward(x, params, use_bf16=True)
    assert out.shape == (batch, H3), out.shape
    assert jnp.allclose(out, ref, atol=1e-2, rtol=1e-2), "mismatch vs reference"

    print("KERNEL_OK")
</pallas_src>

<mosaic_0001>
module attributes {stable_mosaic.version = 11 : i64} {
  func.func @discriminator_kernel(%arg0: i32, %arg1: memref<64x256xbf16, #tpu.memory_space<vmem>>, %arg2: memref<512x64xbf16, #tpu.memory_space<vmem>>, %arg3: memref<512x1xf32, #tpu.memory_space<vmem>>, %arg4: memref<256x512xbf16, #tpu.memory_space<vmem>>, %arg5: memref<256x1xf32, #tpu.memory_space<vmem>>, %arg6: memref<8x256xbf16, #tpu.memory_space<vmem>>, %arg7: memref<8x1xf32, #tpu.memory_space<vmem>>, %arg8: memref<1x256xf32, #tpu.memory_space<vmem>>) attributes {dimension_semantics = [#tpu.dimension_semantics<parallel>], iteration_bounds = array<i64: 2>, scalar_prefetch = 0 : i64, scratch_operands = 0 : i64, tpu.core_type = #tpu.core_type<tc>, window_params = [{transform_indices = @transform_0, window_bounds = array<i64: 64, 256>}, {pipeline_mode = #tpu.pipeline_mode<synchronous>, transform_indices = @transform_1, window_bounds = array<i64: 512, 64>}, {pipeline_mode = #tpu.pipeline_mode<synchronous>, transform_indices = @transform_2, window_bounds = array<i64: 512, 1>}, {pipeline_mode = #tpu.pipeline_mode<synchronous>, transform_indices = @transform_3, window_bounds = array<i64: 256, 512>}, {pipeline_mode = #tpu.pipeline_mode<synchronous>, transform_indices = @transform_4, window_bounds = array<i64: 256, 1>}, {pipeline_mode = #tpu.pipeline_mode<synchronous>, transform_indices = @transform_5, window_bounds = array<i64: 8, 256>}, {pipeline_mode = #tpu.pipeline_mode<synchronous>, transform_indices = @transform_6, window_bounds = array<i64: 8, 1>}, {transform_indices = @transform_7, window_bounds = array<i64: 1, 256>}]} {
    %c0 = arith.constant 0 : index
    %c0_0 = arith.constant 0 : index
    %0 = vector.load %arg2[%c0, %c0_0] : memref<512x64xbf16, #tpu.memory_space<vmem>>, vector<512x64xbf16>
    %c0_1 = arith.constant 0 : index
    %c0_2 = arith.constant 0 : index
    %1 = vector.load %arg1[%c0_1, %c0_2] : memref<64x256xbf16, #tpu.memory_space<vmem>>, vector<64x256xbf16>
    %cst = arith.constant dense<0.000000e+00> : vector<512x256xf32>
    %2 = tpu.matmul %0, %1, %cst {dimension_numbers = #tpu.dot_dimension_numbers<[1], [0], [0], [1], [0, 0, 1, 1], [], []>} : vector<512x64xbf16>, vector<64x256xbf16>, vector<512x256xf32> -> vector<512x256xf32>
    %c0_3 = arith.constant 0 : index
    %c0_4 = arith.constant 0 : index
    %3 = vector.load %arg3[%c0_3, %c0_4] : memref<512x1xf32, #tpu.memory_space<vmem>>, vector<512x1xf32>
    %4 = vector.broadcast %3 : vector<512x1xf32> to vector<512x256xf32>
    %5 = arith.addf %2, %4 : vector<512x256xf32>
    %cst_5 = arith.constant 2.000000e-01 : f32
    %6 = vector.broadcast %cst_5 : f32 to vector<512x256xf32>
    %7 = arith.mulf %6, %5 : vector<512x256xf32>
    %8 = arith.maximumf %5, %7 : vector<512x256xf32>
    %9 = arith.truncf %8 : vector<512x256xf32> to vector<512x256xbf16>
    %c0_6 = arith.constant 0 : index
    %c0_7 = arith.constant 0 : index
    %10 = vector.load %arg4[%c0_6, %c0_7] : memref<256x512xbf16, #tpu.memory_space<vmem>>, vector<256x512xbf16>
    %cst_8 = arith.constant dense<0.000000e+00> : vector<256x256xf32>
    %11 = tpu.matmul %10, %9, %cst_8 {dimension_numbers = #tpu.dot_dimension_numbers<[1], [0], [0], [1], [0, 0, 1, 1], [], []>} : vector<256x512xbf16>, vector<512x256xbf16>, vector<256x256xf32> -> vector<256x256xf32>
    %c0_9 = arith.constant 0 : index
    %c0_10 = arith.constant 0 : index
    %12 = vector.load %arg5[%c0_9, %c0_10] : memref<256x1xf32, #tpu.memory_space<vmem>>, vector<256x1xf32>
    %13 = vector.broadcast %12 : vector<256x1xf32> to vector<256x256xf32>
    %14 = arith.addf %11, %13 : vector<256x256xf32>
    %cst_11 = arith.constant 2.000000e-01 : f32
    %15 = vector.broadcast %cst_11 : f32 to vector<256x256xf32>
    %16 = arith.mulf %15, %14 : vector<256x256xf32>
    %17 = arith.maximumf %14, %16 : vector<256x256xf32>
    %18 = arith.truncf %17 : vector<256x256xf32> to vector<256x256xbf16>
    %c0_12 = arith.constant 0 : index
    %c0_13 = arith.constant 0 : index
    %19 = vector.load %arg6[%c0_12, %c0_13] : memref<8x256xbf16, #tpu.memory_space<vmem>>, vector<8x256xbf16>
    %cst_14 = arith.constant dense<0.000000e+00> : vector<8x256xf32>
    %20 = tpu.matmul %19, %18, %cst_14 {dimension_numbers = #tpu.dot_dimension_numbers<[1], [0], [0], [1], [0, 0, 1, 1], [], []>} : vector<8x256xbf16>, vector<256x256xbf16>, vector<8x256xf32> -> vector<8x256xf32>
    %c0_15 = arith.constant 0 : index
    %c0_16 = arith.constant 0 : index
    %21 = vector.load %arg7[%c0_15, %c0_16] : memref<8x1xf32, #tpu.memory_space<vmem>>, vector<8x1xf32>
    %22 = vector.broadcast %21 : vector<8x1xf32> to vector<8x256xf32>
    %23 = arith.addf %20, %22 : vector<8x256xf32>
    %24 = vector.extract_strided_slice %23 {offsets = [0, 0], sizes = [1, 256], strides = [1, 1]} : vector<8x256xf32> to vector<1x256xf32>
    %c0_17 = arith.constant 0 : index
    %c0_18 = arith.constant 0 : index
    %25 = vector.load %arg8[%c0_17, %c0_18] : memref<1x256xf32, #tpu.memory_space<vmem>>, vector<1x256xf32>
    tpu.vector_store %arg8[%c0_17, %c0_18], %24 {strides = array<i32>} : memref<1x256xf32, #tpu.memory_space<vmem>>, vector<1x256xf32>,
    return
  }
  func.func @transform_0(%arg0: i32) -> (i32, i32) {
    %c0_i32 = arith.constant 0 : i32
    %c0_i32_0 = arith.constant 0 : i32
    return %c0_i32, %arg0 : i32, i32
  }
  func.func @transform_1(%arg0: i32) -> (i32, i32) {
    %c0_i32 = arith.constant 0 : i32
    %c0_i32_0 = arith.constant 0 : i32
    %c0_i32_1 = arith.constant 0 : i32
    return %c0_i32, %c0_i32_0 : i32, i32
  }
  func.func @transform_2(%arg0: i32) -> (i32, i32) {
    %c0_i32 = arith.constant 0 : i32
    %c0_i32_0 = arith.constant 0 : i32
    %c0_i32_1 = arith.constant 0 : i32
    return %c0_i32, %c0_i32_0 : i32, i32
  }
  func.func @transform_3(%arg0: i32) -> (i32, i32) {
    %c0_i32 = arith.constant 0 : i32
    %c0_i32_0 = arith.constant 0 : i32
    %c0_i32_1 = arith.constant 0 : i32
    return %c0_i32, %c0_i32_0 : i32, i32
  }
  func.func @transform_4(%arg0: i32) -> (i32, i32) {
    %c0_i32 = arith.constant 0 : i32
    %c0_i32_0 = arith.constant 0 : i32
    %c0_i32_1 = arith.constant 0 : i32
    return %c0_i32, %c0_i32_0 : i32, i32
  }
  func.func @transform_5(%arg0: i32) -> (i32, i32) {
    %c0_i32 = arith.constant 0 : i32
    %c0_i32_0 = arith.constant 0 : i32
    %c0_i32_1 = arith.constant 0 : i32
    return %c0_i32, %c0_i32_0 : i32, i32
  }
  func.func @transform_6(%arg0: i32) -> (i32, i32) {
    %c0_i32 = arith.constant 0 : i32
    %c0_i32_0 = arith.constant 0 : i32
    %c0_i32_1 = arith.constant 0 : i32
    return %c0_i32, %c0_i32_0 : i32, i32
  }
  func.func @transform_7(%arg0: i32) -> (i32, i32) {
    %c0_i32 = arith.constant 0 : i32
    %c0_i32_0 = arith.constant 0 : i32
    return %c0_i32, %arg0 : i32, i32
  }
}

</mosaic_0001>

<llo_original>
// kernel: discriminator_forward.1
$region0: #{discriminator_forward.1}
  #allocation0 [shape = 'u32[]', space=smem, size = 0x4, offset = 0x4, fixed_abs, tag = 'smem constant byte address 0x4 - core index']
  #allocation1 [shape = 'u32[144,128]{1,0:T(1,128)}', space=vmem, size = 0x12000, scoped, tag = 'internal scratch']
  %s0 = inlined_call_operand.vmem [shape: bf16[64,512], index: 0, kind: input, shape index: {}]
  %s1 = inlined_call_operand.vmem [shape: bf16[512,64], index: 1, kind: input, shape index: {}]
  %s2 = inlined_call_operand.vmem [shape: f32[512,1], index: 2, kind: input, shape index: {}]
  %s3 = inlined_call_operand.vmem [shape: bf16[256,512], index: 3, kind: input, shape index: {}]
  %s4 = inlined_call_operand.vmem [shape: f32[256,1], index: 4, kind: input, shape index: {}]
  %s5 = inlined_call_operand.vmem [shape: bf16[8,256], index: 5, kind: input, shape index: {}]
  %s6 = inlined_call_operand.vmem [shape: f32[8,1], index: 6, kind: input, shape index: {}]
  %s7 = inlined_call_operand.hbm [shape: f32[1,512], index: 7, kind: output, shape index: {}]
  %s8 = sld [smem:[#allocation0]]
  $region99: #{discriminator_forward.1} parent=0
    _
  %s10 = ssub.s32 1, %s8
  %s11 = scalar_select 0, %s10, %s8
  $region1: #{discriminator_forward.1} parent=0
    #allocation2 [shape = 'u8[65536]{0}', space=vmem, size = 0x10000, scoped, tag = 'input window, operand 0']
    #allocation3 [shape = 'u8[2048]{0}', space=vmem, size = 0x800, scoped, tag = 'output window, operand 0']
    #allocation4 [shape = 's32[2]{0}', space=sflag, size = 0x8, scoped, tag = 'scoped memory for discriminator_forward.1']
    %12 = vsyncpa [#allocation4], 0
    %s13 = scalar_lea.sflag [#allocation4], 1
    %14 = vsyncpa %s13, 0
    loop: start=0, step=1, limit=4
    $region2: #{discriminator_forward.1} parent=1 // loop_pre_header
      _
    $region3: #{discriminator_forward.1} parent=1 // loop_header
      %s16 = sphi 0, %s20
      %p17 = scmp.ge.s32.totalorder %s16, 4
      %s26 = sphi 0, %s28
      %s29 = sphi 0, %s26
      %s30 = sphi 0, %s29
      %s46 = sphi 0, %s30
      %s50 = sphi 0, %s50
      %s52 = sphi 0, %s50
      %s53 = sphi 0, %s52
      %s67 = sphi 0, %s53
      %s71 = sphi 0, %s71
      %s73 = sphi 0, %s71
      %s74 = sphi 0, %s73
      %s88 = sphi 0, %s74
      %s92 = sphi 0, %s92
      %s94 = sphi 0, %s92
      %s95 = sphi 0, %s94
      %s109 = sphi 0, %s95
      %s113 = sphi 0, %s113
      %s115 = sphi 0, %s113
      %s116 = sphi 0, %s115
      %s130 = sphi 0, %s116
      %s134 = sphi 0, %s134
      %s136 = sphi 0, %s134
      %s137 = sphi 0, %s136
      %s151 = sphi 0, %s137
      %s155 = sphi 0, %s155
      %s157 = sphi 0, %s155
      %s158 = sphi 0, %s157
      %s172 = sphi 0, %s158
      %s178 = sphi 0, %s180
      %s181 = sphi 0, %s178
      %s182 = sphi 0, %s181
      %s198 = sphi 0, %s182
    $region4: #{discriminator_forward.1} parent=1 // loop_header_branch
      %19 = sbr.rel (%p17) target = $region8
    $region5: #{discriminator_forward.1} parent=1 // loop_body
      %s21 = ssub.s32 %s16, 1
      %s22 = ssub.s32 %s16, 2
      %s23 = sadd.s32 %s16, 1
      %s24 = ssub.s32 %s16, %s23
      %p25 = scmp.eq.s32.totalorder %s24, 0
      %s27 = sadd.s32 %s26, 1
      %s28 = scalar_select %p25, %s26, %s27
      %p31 = pneg %p25
      %p32 = scmp.eq.s32.totalorder %s16, 1
      %p33 = por %p31, %p32
      %p34 = scmp.ne.s32.totalorder %s26, %s29
      %p35 = scmp.eq.s32.totalorder %s16, 0
      %p36 = por %p34, %p35
      %p37 = scmp.ne.s32.totalorder %s26, %s29
      %p38 = scmp.eq.s32.totalorder %s21, 1
      %p39 = por %p37, %p38
      %p40 = scmp.ne.s32.totalorder %s29, %s30
      %p41 = scmp.eq.s32.totalorder %s21, 0
      %p42 = por %p40, %p41
      %p43 = scmp.ne.s32.totalorder %s29, %s30
      %p44 = scmp.eq.s32.totalorder %s22, 1
      %p45 = por %p43, %p44
      %p47 = scmp.ne.s32.totalorder %s30, %s46
      %p48 = scmp.eq.s32.totalorder %s22, 0
      %p49 = por %p47, %p48
      %s51 = sadd.s32 %s50, 1
      %p54 = scmp.eq.s32.totalorder %s16, 1
      %p55 = scmp.ne.s32.totalorder %s50, %s52
      %p56 = scmp.eq.s32.totalorder %s16, 0
      %p57 = por %p55, %p56
      %p58 = scmp.ne.s32.totalorder %s50, %s52
      %p59 = scmp.eq.s32.totalorder %s21, 1
      %p60 = por %p58, %p59
      %p61 = scmp.ne.s32.totalorder %s52, %s53
      %p62 = scmp.eq.s32.totalorder %s21, 0
      %p63 = por %p61, %p62
      %p64 = scmp.ne.s32.totalorder %s52, %s53
      %p65 = scmp.eq.s32.totalorder %s22, 1
      %p66 = por %p64, %p65
      %p68 = scmp.ne.s32.totalorder %s53, %s67
      %p69 = scmp.eq.s32.totalorder %s22, 0
      %p70 = por %p68, %p69
      %s72 = sadd.s32 %s71, 1
      %p75 = scmp.eq.s32.totalorder %s16, 1
      %p76 = scmp.ne.s32.totalorder %s71, %s73
      %p77 = scmp.eq.s32.totalorder %s16, 0
      %p78 = por %p76, %p77
      %p79 = scmp.ne.s32.totalorder %s71, %s73
      %p80 = scmp.eq.s32.totalorder %s21, 1
      %p81 = por %p79, %p80
      %p82 = scmp.ne.s32.totalorder %s73, %s74
      %p83 = scmp.eq.s32.totalorder %s21, 0
      %p84 = por %p82, %p83
      %p85 = scmp.ne.s32.totalorder %s73, %s74
      %p86 = scmp.eq.s32.totalorder %s22, 1
      %p87 = por %p85, %p86
      %p89 = scmp.ne.s32.totalorder %s74, %s88
      %p90 = scmp.eq.s32.totalorder %s22, 0
      %p91 = por %p89, %p90
      %s93 = sadd.s32 %s92, 1
      %p96 = scmp.eq.s32.totalorder %s16, 1
      %p97 = scmp.ne.s32.totalorder %s92, %s94
      %p98 = scmp.eq.s32.totalorder %s16, 0
      %p99 = por %p97, %p98
      %p100 = scmp.ne.s32.totalorder %s92, %s94
      %p101 = scmp.eq.s32.totalorder %s21, 1
      %p102 = por %p100, %p101
      %p103 = scmp.ne.s32.totalorder %s94, %s95
      %p104 = scmp.eq.s32.totalorder %s21, 0
      %p105 = por %p103, %p104
      %p106 = scmp.ne.s32.totalorder %s94, %s95
      %p107 = scmp.eq.s32.totalorder %s22, 1
      %p108 = por %p106, %p107
      %p110 = scmp.ne.s32.totalorder %s95, %s109
      %p111 = scmp.eq.s32.totalorder %s22, 0
      %p112 = por %p110, %p111
      %s114 = sadd.s32 %s113, 1
      %p117 = scmp.eq.s32.totalorder %s16, 1
      %p118 = scmp.ne.s32.totalorder %s113, %s115
      %p119 = scmp.eq.s32.totalorder %s16, 0
      %p120 = por %p118, %p119
      %p121 = scmp.ne.s32.totalorder %s113, %s115
      %p122 = scmp.eq.s32.totalorder %s21, 1
      %p123 = por %p121, %p122
      %p124 = scmp.ne.s32.totalorder %s115, %s116
      %p125 = scmp.eq.s32.totalorder %s21, 0
      %p126 = por %p124, %p125
      %p127 = scmp.ne.s32.totalorder %s115, %s116
      %p128 = scmp.eq.s32.totalorder %s22, 1
      %p129 = por %p127, %p128
      %p131 = scmp.ne.s32.totalorder %s116, %s130
      %p132 = scmp.eq.s32.totalorder %s22, 0
      %p133 = por %p131, %p132
      %s135 = sadd.s32 %s134, 1
      %p138 = scmp.eq.s32.totalorder %s16, 1
      %p139 = scmp.ne.s32.totalorder %s134, %s136
      %p140 = scmp.eq.s32.totalorder %s16, 0
      %p141 = por %p139, %p140
      %p142 = scmp.ne.s32.totalorder %s134, %s136
      %p143 = scmp.eq.s32.totalorder %s21, 1
      %p144 = por %p142, %p143
      %p145 = scmp.ne.s32.totalorder %s136, %s137
      %p146 = scmp.eq.s32.totalorder %s21, 0
      %p147 = por %p145, %p146
      %p148 = scmp.ne.s32.totalorder %s136, %s137
      %p149 = scmp.eq.s32.totalorder %s22, 1
      %p150 = por %p148, %p149
      %p152 = scmp.ne.s32.totalorder %s137, %s151
      %p153 = scmp.eq.s32.totalorder %s22, 0
      %p154 = por %p152, %p153
      %s156 = sadd.s32 %s155, 1
      %p159 = scmp.eq.s32.totalorder %s16, 1
      %p160 = scmp.ne.s32.totalorder %s155, %s157
      %p161 = scmp.eq.s32.totalorder %s16, 0
      %p162 = por %p160, %p161
      %p163 = scmp.ne.s32.totalorder %s155, %s157
      %p164 = scmp.eq.s32.totalorder %s21, 1
      %p165 = por %p163, %p164
      %p166 = scmp.ne.s32.totalorder %s157, %s158
      %p167 = scmp.eq.s32.totalorder %s21, 0
      %p168 = por %p166, %p167
      %p169 = scmp.ne.s32.totalorder %s157, %s158
      %p170 = scmp.eq.s32.totalorder %s22, 1
      %p171 = por %p169, %p170
      %p173 = scmp.ne.s32.totalorder %s158, %s172
      %p174 = scmp.eq.s32.totalorder %s22, 0
      %p175 = por %p173, %p174
      %s176 = ssub.s32 %s16, %s23
      %p177 = scmp.eq.s32.totalorder %s176, 0
      %s179 = sadd.s32 %s178, 1
      %s180 = scalar_select %p177, %s178, %s179
      %p183 = pneg %p177
      %p184 = scmp.eq.s32.totalorder %s16, 1
      %p185 = por %p183, %p184
      %p186 = scmp.ne.s32.totalorder %s178, %s181
      %p187 = scmp.eq.s32.totalorder %s16, 0
      %p188 = por %p186, %p187
      %p189 = scmp.ne.s32.totalorder %s178, %s181
      %p190 = scmp.eq.s32.totalorder %s21, 1
      %p191 = por %p189, %p190
      %p192 = scmp.ne.s32.totalorder %s181, %s182
      %p193 = scmp.eq.s32.totalorder %s21, 0
      %p194 = por %p192, %p193
      %p195 = scmp.ne.s32.totalorder %s181, %s182
      %p196 = scmp.eq.s32.totalorder %s22, 1
      %p197 = por %p195, %p196
      %p199 = scmp.ne.s32.totalorder %s182, %s198
      %p200 = scmp.eq.s32.totalorder %s22, 0
      %p201 = por %p199, %p200
      %p202 = scmp.le.s32.totalorder 1, %s16
      %p203 = scmp.lt.s32.totalorder %s16, 3
      %p204 = pnand %p202, %p203
      %p205 = pneg %p204
      // Predicated region
      $region9: #{discriminator_forward.1} parent=5 // pred_check
        _
      $region10: #{discriminator_forward.1} parent=5 // pred_check_branch
        %207 = sbr.rel (%p204) target = $region12
      $region11: #{discriminator_forward.1} parent=5 // pred_region
        %s208 = ssub.s32 %s16, 1
        // Predicated region
        $region13: #{discriminator_forward.1} parent=11 // pred_check
          %p209 = pneg %p63
        $region14: #{discriminator_forward.1} parent=11 // pred_check_branch
          %211 = sbr.rel (%p209) target = $region16
        $region15: #{discriminator_forward.1} parent=11 // pred_region
          _
        $region16: #{discriminator_forward.1} parent=11 // pred_fallthru
          _
        // Predicated region
        $region17: #{discriminator_forward.1} parent=11 // pred_check
          %p212 = pneg %p84
        $region18: #{discriminator_forward.1} parent=11 // pred_check_branch
          %214 = sbr.rel (%p212) target = $region20
        $region19: #{discriminator_forward.1} parent=11 // pred_region
          _
        $region20: #{discriminator_forward.1} parent=11 // pred_fallthru
          _
        // Predicated region
        $region21: #{discriminator_forward.1} parent=11 // pred_check
          %p215 = pneg %p105
        $region22: #{discriminator_forward.1} parent=11 // pred_check_branch
          %217 = sbr.rel (%p215) target = $region24
        $region23: #{discriminator_forward.1} parent=11 // pred_region
          _
        $region24: #{discriminator_forward.1} parent=11 // pred_fallthru
          _
        // Predicated region
        $region25: #{discriminator_forward.1} parent=11 // pred_check
          %p218 = pneg %p126
        $region26: #{discriminator_forward.1} parent=11 // pred_check_branch
          %220 = sbr.rel (%p218) target = $region28
        $region27: #{discriminator_forward.1} parent=11 // pred_region
          _
        $region28: #{discriminator_forward.1} parent=11 // pred_fallthru
          _
        // Predicated region
        $region29: #{discriminator_forward.1} parent=11 // pred_check
          %p221 = pneg %p147
        $region30: #{discriminator_forward.1} parent=11 // pred_check_branch
          %223 = sbr.rel (%p221) target = $region32
        $region31: #{discriminator_forward.1} parent=11 // pred_region
          _
        $region32: #{discriminator_forward.1} parent=11 // pred_fallthru
          _
        // Predicated region
        $region33: #{discriminator_forward.1} parent=11 // pred_check
          %p224 = pneg %p168
        $region34: #{discriminator_forward.1} parent=11 // pred_check_branch
          %226 = sbr.rel (%p224) target = $region36
        $region35: #{discriminator_forward.1} parent=11 // pred_region
          _
        $region36: #{discriminator_forward.1} parent=11 // pred_fallthru
          _
      $region12: #{discriminator_forward.1} parent=5 // pred_fallthru
        _
      %p227 = scmp.lt.s32.totalorder %s16, 2
      // Predicated region
      $region37: #{discriminator_forward.1} parent=5 // pred_check
        %p228 = pneg %p227
      $region38: #{discriminator_forward.1} parent=5 // pred_check_branch
        %230 = sbr.rel (%p228) target = $region40
      $region39: #{discriminator_forward.1} parent=5 // pred_region
        // Predicated region
        $region41: #{discriminator_forward.1} parent=39 // pred_check
          %p231 = pneg %p36
        $region42: #{discriminator_forward.1} parent=39 // pred_check_branch
          %233 = sbr.rel (%p231) target = $region44
        $region43: #{discriminator_forward.1} parent=39 // pred_region
          %s234 = sand.u32 %s26, 1
          %s235 = sand.u32 %s26, 1
          %s236 = smul.addr %s235, 64
          %s237 = scalar_lea.vmem [#allocation2], %s236
          %s238 = smul.u32 2, %s16
          %s239 = smul.addr %s238, 4
          %s240 = scalar_lea.vmem %s0, %s239
          // Predicated region
          $region45: #{discriminator_forward.1} parent=43 // pred_check
            _
          $region46: #{discriminator_forward.1} parent=43 // pred_check_branch
            %242 = sbr.rel (0) target = $region48
          $region47: #{discriminator_forward.1} parent=43 // pred_region
            // Predicated region
            $region49: #{discriminator_forward.1} parent=47 // pred_check
              _
            $region50: #{discriminator_forward.1} parent=47 // pred_check_branch
              %244 = sbr.rel (0) target = $region52
            $region51: #{discriminator_forward.1} parent=47 // pred_region
              // Predicated region
              $region64: #{discriminator_forward.1} parent=51 // pred_check
                _
              $region65: #{discriminator_forward.1} parent=51 // pred_check_branch
                %273 = sbr.rel (0) target = $region67
              $region66: #{discriminator_forward.1} parent=51 // pred_region
                loop: start=0, step=1, limit=1
                $region68: #{discriminator_forward.1} parent=66 // loop_pre_header
                  _
                $region69: #{discriminator_forward.1} parent=66 // loop_header
                  %s275 = sphi 0, %s279
                  %p276 = scmp.ge.s32.totalorder %s275, 1
                  %s280 = sphi %s240, %s240
                  %s281 = sphi %s237, %s237
                $region70: #{discriminator_forward.1} parent=66 // loop_header_branch
                  %278 = sbr.rel (%p276) target = $region74
                $region71: #{discriminator_forward.1} parent=66 // loop_body
                  %v282 = vld [vmem:[%s280] sm:$0xff]
                  %283 = vst [vmem:[%s281] sm:$0xff] %v282
                  %v284 = vld [vmem:[%s280 + $0x10] sm:$0xff]
                  %285 = vst [vmem:[%s281 + $0x8] sm:$0xff] %v284
                  %v286 = vld [vmem:[%s280 + $0x20] sm:$0xff]
                  %287 = vst [vmem:[%s281 + $0x10] sm:$0xff] %v286
                  %v288 = vld [vmem:[%s280 + $0x30] sm:$0xff]
                  %289 = vst [vmem:[%s281 + $0x18] sm:$0xff] %v288
                  %v290 = vld [vmem:[%s280 + $0x40] sm:$0xff]
                  %291 = vst [vmem:[%s281 + $0x20] sm:$0xff] %v290
                  %v292 = vld [vmem:[%s280 + $0x50] sm:$0xff]
                  %293 = vst [vmem:[%s281 + $0x28] sm:$0xff] %v292
                  %v294 = vld [vmem:[%s280 + $0x60] sm:$0xff]
                  %295 = vst [vmem:[%s281 + $0x30] sm:$0xff] %v294
                  %v296 = vld [vmem:[%s280 + $0x70] sm:$0xff]
                  %297 = vst [vmem:[%s281 + $0x38] sm:$0xff] %v296
                $region72: #{discriminator_forward.1} parent=66 // loop_footer
                  %s279 = sadd.s32 1, %s275
                $region73: #{discriminator_forward.1} parent=66 // loop_footer_branch
                  %274 = sbr.rel target = $region69
                $region74: #{discriminator_forward.1} parent=66 // loop_exit
                  _
              $region67: #{discriminator_forward.1} parent=51 // pred_fallthru
                _
              // Predicated region
              $region75: #{discriminator_forward.1} parent=51 // pred_check
                _
              $region76: #{discriminator_forward.1} parent=51 // pred_check_branch
                %299 = sbr.rel target = $region78
              $region77: #{discriminator_forward.1} parent=51 // pred_region
                _
              $region78: #{discriminator_forward.1} parent=51 // pred_fallthru
                _
            $region52: #{discriminator_forward.1} parent=47 // pred_fallthru
              _
            // Predicated region
            $region53: #{discriminator_forward.1} parent=47 // pred_check
              _
            $region54: #{discriminator_forward.1} parent=47 // pred_check_branch
              %246 = sbr.rel target = $region56
            $region55: #{discriminator_forward.1} parent=47 // pred_region
              loop: start=0, step=1, limit=1
              $region57: #{discriminator_forward.1} parent=55 // loop_pre_header
                _
              $region58: #{discriminator_forward.1} parent=55 // loop_header
                %s249 = sphi 0, %s253
                %p250 = scmp.ge.s32.totalorder %s249, 1
                %s254 = sphi %s240, %s240
                %s255 = sphi %s237, %s237
              $region59: #{discriminator_forward.1} parent=55 // loop_header_branch
                %252 = sbr.rel (%p250) target = $region63
              $region60: #{discriminator_forward.1} parent=55 // loop_body
                %v256 = vld [vmem:[%s254] sm:$0xff]
                %257 = vst [vmem:[%s255] sm:$0xff] %v256
                %v258 = vld [vmem:[%s254 + $0x10] sm:$0xff]
                %259 = vst [vmem:[%s255 + $0x8] sm:$0xff] %v258
                %v260 = vld [vmem:[%s254 + $0x20] sm:$0xff]
                %261 = vst [vmem:[%s255 + $0x10] sm:$0xff] %v260
                %v262 = vld [vmem:[%s254 + $0x30] sm:$0xff]
                %263 = vst [vmem:[%s255 + $0x18] sm:$0xff] %v262
                %v264 = vld [vmem:[%s254 + $0x40] sm:$0xff]
                %265 = vst [vmem:[%s255 + $0x20] sm:$0xff] %v264
                %v266 = vld [vmem:[%s254 + $0x50] sm:$0xff]
                %267 = vst [vmem:[%s255 + $0x28] sm:$0xff] %v266
                %v268 = vld [vmem:[%s254 + $0x60] sm:$0xff]
                %269 = vst [vmem:[%s255 + $0x30] sm:$0xff] %v268
                %v270 = vld [vmem:[%s254 + $0x70] sm:$0xff]
                %271 = vst [vmem:[%s255 + $0x38] sm:$0xff] %v270
              $region61: #{discriminator_forward.1} parent=55 // loop_footer
                %s253 = sadd.s32 1, %s249
              $region62: #{discriminator_forward.1} parent=55 // loop_footer_branch
                %248 = sbr.rel target = $region58
              $region63: #{discriminator_forward.1} parent=55 // loop_exit
                _
            $region56: #{discriminator_forward.1} parent=47 // pred_fallthru
              _
          $region48: #{discriminator_forward.1} parent=43 // pred_fallthru
            _
          %300 = vnop
        $region44: #{discriminator_forward.1} parent=39 // pred_fallthru
          _
      $region40: #{discriminator_forward.1} parent=5 // pred_fallthru
        _
      %p301 = scmp.le.s32.totalorder 1, %s16
      %p302 = scmp.lt.s32.totalorder %s16, 3
      %p303 = pnand %p301, %p302
      %p304 = pneg %p303
      // Predicated region
      $region79: #{discriminator_forward.1} parent=5 // pred_check
        _
      $region80: #{discriminator_forward.1} parent=5 // pred_check_branch
        %306 = sbr.rel (%p303) target = $region82
      $region81: #{discriminator_forward.1} parent=5 // pred_region
        %s307 = ssub.s32 %s16, 1
        %s308 = sand.u32 %s29, 1
        %s309 = sand.u32 %s29, 1
        %s310 = smul.addr %s309, 64
        %s311 = scalar_lea.vmem [#allocation2], %s310
        // Predicated region
        $region83: #{discriminator_forward.1} parent=81 // pred_check
          %p312 = pneg %p42
        $region84: #{discriminator_forward.1} parent=81 // pred_check_branch
          %314 = sbr.rel (%p312) target = $region86
        $region85: #{discriminator_forward.1} parent=81 // pred_region
          _
        $region86: #{discriminator_forward.1} parent=81 // pred_fallthru
          _
        %s315 = sand.u32 %s29, 1
        %s316 = sand.u32 %s29, 1
        %s317 = smul.addr %s316, 64
        %s318 = scalar_lea.vmem [#allocation2], %s317
        %p319 = pneg %p42
        %p320 = pneg %p39
        %p321 = pneg %p63
        %p322 = pneg %p60
        %p323 = pneg %p84
        %p324 = pneg %p81
        %p325 = pneg %p105
        %p326 = pneg %p102
        %p327 = pneg %p126
        %p328 = pneg %p123
        %p329 = pneg %p147
        %p330 = pneg %p144
        %p331 = pneg %p168
        %p332 = pneg %p165
        %p333 = pneg %p194
        %p334 = pneg %p191
        %s335 = sand.u32 %s181, 1
        %s336 = scalar_lea.sflag [#allocation4], %s335
        %s337 = sand.u32 %s181, 1
        %s338 = smul.addr %s337, 2
        %s339 = scalar_lea.vmem [#allocation3], %s338
        %s340 = smul.u32 2, %s21
        %s341 = smul.u32 2, %s21
        %v343 = vld [vmem:[%s1] sm:$0xf]
        %v344 = vld [vmem:[%s1 + $0x4] sm:$0xf]
        %v345 = vld [vmem:[%s1 + $0x8] sm:$0xf]
        %v346 = vld [vmem:[%s1 + $0xc] sm:$0xf]
        %v347 = vld [vmem:[%s1 + $0x10] sm:$0xf]
        %v348 = vld [vmem:[%s1 + $0x14] sm:$0xf]
        %v349 = vld [vmem:[%s1 + $0x18] sm:$0xf]
        %v350 = vld [vmem:[%s1 + $0x1c] sm:$0xf]
        %v351 = vld [vmem:[%s1 + $0x20] sm:$0xf]
        %v352 = vld [vmem:[%s1 + $0x24] sm:$0xf]
        %v353 = vld [vmem:[%s1 + $0x28] sm:$0xf]
        %v354 = vld [vmem:[%s1 + $0x2c] sm:$0xf]
        %v355 = vld [vmem:[%s1 + $0x30] sm:$0xf]
        %v356 = vld [vmem:[%s1 + $0x34] sm:$0xf]
        %v357 = vld [vmem:[%s1 + $0x38] sm:$0xf]
        %v358 = vld [vmem:[%s1 + $0x3c] sm:$0xf]
        %v359 = vld [vmem:[%s1 + $0x40] sm:$0xf]
        %v360 = vld [vmem:[%s1 + $0x44] sm:$0xf]
        %v361 = vld [vmem:[%s1 + $0x48] sm:$0xf]
        %v362 = vld [vmem:[%s1 + $0x4c] sm:$0xf]
        %v363 = vld [vmem:[%s1 + $0x50] sm:$0xf]
        %v364 = vld [vmem:[%s1 + $0x54] sm:$0xf]
        %v365 = vld [vmem:[%s1 + $0x58] sm:$0xf]
        %v366 = vld [vmem:[%s1 + $0x5c] sm:$0xf]
        %v367 = vld [vmem:[%s1 + $0x60] sm:$0xf]
        %v368 = vld [vmem:[%s1 + $0x64] sm:$0xf]
        %v369 = vld [vmem:[%s1 + $0x68] sm:$0xf]
        %v370 = vld [vmem:[%s1 + $0x6c] sm:$0xf]
        %v371 = vld [vmem:[%s1 + $0x70] sm:$0xf]
        %v372 = vld [vmem:[%s1 + $0x74] sm:$0xf]
        %v373 = vld [vmem:[%s1 + $0x78] sm:$0xf]
        %v374 = vld [vmem:[%s1 + $0x7c] sm:$0xf]
        %v375 = vld [vmem:[%s1 + $0x80] sm:$0xf]
        %v376 = vld [vmem:[%s1 + $0x84] sm:$0xf]
        %v377 = vld [vmem:[%s1 + $0x88] sm:$0xf]
        %v378 = vld [vmem:[%s1 + $0x8c] sm:$0xf]
        %v379 = vld [vmem:[%s1 + $0x90] sm:$0xf]
        %v380 = vld [vmem:[%s1 + $0x94] sm:$0xf]
        %v381 = vld [vmem:[%s1 + $0x98] sm:$0xf]
        %v382 = vld [vmem:[%s1 + $0x9c] sm:$0xf]
        %v383 = vld [vmem:[%s1 + $0xa0] sm:$0xf]
        %v384 = vld [vmem:[%s1 + $0xa4] sm:$0xf]
        %v385 = vld [vmem:[%s1 + $0xa8] sm:$0xf]
        %v386 = vld [vmem:[%s1 + $0xac] sm:$0xf]
        %v387 = vld [vmem:[%s1 + $0xb0] sm:$0xf]
        %v388 = vld [vmem:[%s1 + $0xb4] sm:$0xf]
        %v389 = vld [vmem:[%s1 + $0xb8] sm:$0xf]
        %v390 = vld [vmem:[%s1 + $0xbc] sm:$0xf]
        %v391 = vld [vmem:[%s1 + $0xc0] sm:$0xf]
        %v392 = vld [vmem:[%s1 + $0xc4] sm:$0xf]
        %v393 = vld [vmem:[%s1 + $0xc8] sm:$0xf]
        %v394 = vld [vmem:[%s1 + $0xcc] sm:$0xf]
        %v395 = vld [vmem:[%s1 + $0xd0] sm:$0xf]
        %v396 = vld [vmem:[%s1 + $0xd4] sm:$0xf]
        %v397 = vld [vmem:[%s1 + $0xd8] sm:$0xf]
        %v398 = vld [vmem:[%s1 + $0xdc] sm:$0xf]
        %v399 = vld [vmem:[%s1 + $0xe0] sm:$0xf]
        %v400 = vld [vmem:[%s1 + $0xe4] sm:$0xf]
        %v401 = vld [vmem:[%s1 + $0xe8] sm:$0xf]
        %v402 = vld [vmem:[%s1 + $0xec] sm:$0xf]
        %v403 = vld [vmem:[%s1 + $0xf0] sm:$0xf]
        %v404 = vld [vmem:[%s1 + $0xf4] sm:$0xf]
        %v405 = vld [vmem:[%s1 + $0xf8] sm:$0xf]
        %v406 = vld [vmem:[%s1 + $0xfc] sm:$0xf]
        %v407 = vld [vmem:[%s311] sm:$0xff]
        %v408 = vld [vmem:[%s311 + $0x8] sm:$0xff]
        %v409 = vld [vmem:[%s311 + $0x10] sm:$0xff]
        %v410 = vld [vmem:[%s311 + $0x18] sm:$0xff]
        %v411 = vld [vmem:[%s311 + $0x20] sm:$0xff]
        %v412 = vld [vmem:[%s311 + $0x28] sm:$0xff]
        %v413 = vld [vmem:[%s311 + $0x30] sm:$0xff]
        %v414 = vld [vmem:[%s311 + $0x38] sm:$0xff]
        %v415 = vld [vmem:[%s2] sm:$0xff]
        %v416 = vld [vmem:[%s2 + $0x8] sm:$0xff]
        %v417 = vld [vmem:[%s2 + $0x10] sm:$0xff]
        %v418 = vld [vmem:[%s2 + $0x18] sm:$0xff]
        %v419 = vld [vmem:[%s2 + $0x20] sm:$0xff]
        %v420 = vld [vmem:[%s2 + $0x28] sm:$0xff]
        %v421 = vld [vmem:[%s2 + $0x30] sm:$0xff]
        %v422 = vld [vmem:[%s2 + $0x38] sm:$0xff]
        %v423 = vld [vmem:[%s2 + $0x40] sm:$0xff]
        %v424 = vld [vmem:[%s2 + $0x48] sm:$0xff]
        %v425 = vld [vmem:[%s2 + $0x50] sm:$0xff]
        %v426 = vld [vmem:[%s2 + $0x58] sm:$0xff]
        %v427 = vld [vmem:[%s2 + $0x60] sm:$0xff]
        %v428 = vld [vmem:[%s2 + $0x68] sm:$0xff]
        %v429 = vld [vmem:[%s2 + $0x70] sm:$0xff]
        %v430 = vld [vmem:[%s2 + $0x78] sm:$0xff]
        %v431 = vld [vmem:[%s2 + $0x80] sm:$0xff]
        %v432 = vld [vmem:[%s2 + $0x88] sm:$0xff]
        %v433 = vld [vmem:[%s2 + $0x90] sm:$0xff]
        %v434 = vld [vmem:[%s2 + $0x98] sm:$0xff]
        %v435 = vld [vmem:[%s2 + $0xa0] sm:$0xff]
        %v436 = vld [vmem:[%s2 + $0xa8] sm:$0xff]
        %v437 = vld [vmem:[%s2 + $0xb0] sm:$0xff]
        %v438 = vld [vmem:[%s2 + $0xb8] sm:$0xff]
        %v439 = vld [vmem:[%s2 + $0xc0] sm:$0xff]
        %v440 = vld [vmem:[%s2 + $0xc8] sm:$0xff]
        %v441 = vld [vmem:[%s2 + $0xd0] sm:$0xff]
        %v442 = vld [vmem:[%s2 + $0xd8] sm:$0xff]
        %v443 = vld [vmem:[%s2 + $0xe0] sm:$0xff]
        %v444 = vld [vmem:[%s2 + $0xe8] sm:$0xff]
        %v445 = vld [vmem:[%s2 + $0xf0] sm:$0xff]
        %v446 = vld [vmem:[%s2 + $0xf8] sm:$0xff]
        %v447 = vld [vmem:[%s2 + $0x100] sm:$0xff]
        %v448 = vld [vmem:[%s2 + $0x108] sm:$0xff]
        %v449 = vld [vmem:[%s2 + $0x110] sm:$0xff]
        %v450 = vld [vmem:[%s2 + $0x118] sm:$0xff]
        %v451 = vld [vmem:[%s2 + $0x120] sm:$0xff]
        %v452 = vld [vmem:[%s2 + $0x128] sm:$0xff]
        %v453 = vld [vmem:[%s2 + $0x130] sm:$0xff]
        %v454 = vld [vmem:[%s2 + $0x138] sm:$0xff]
        %v455 = vld [vmem:[%s2 + $0x140] sm:$0xff]
        %v456 = vld [vmem:[%s2 + $0x148] sm:$0xff]
        %v457 = vld [vmem:[%s2 + $0x150] sm:$0xff]
        %v458 = vld [vmem:[%s2 + $0x158] sm:$0xff]
        %v459 = vld [vmem:[%s2 + $0x160] sm:$0xff]
        %v460 = vld [vmem:[%s2 + $0x168] sm:$0xff]
        %v461 = vld [vmem:[%s2 + $0x170] sm:$0xff]
        %v462 = vld [vmem:[%s2 + $0x178] sm:$0xff]
        %v463 = vld [vmem:[%s2 + $0x180] sm:$0xff]
        %v464 = vld [vmem:[%s2 + $0x188] sm:$0xff]
        %v465 = vld [vmem:[%s2 + $0x190] sm:$0xff]
        %v466 = vld [vmem:[%s2 + $0x198] sm:$0xff]
        %v467 = vld [vmem:[%s2 + $0x1a0] sm:$0xff]
        %v468 = vld [vmem:[%s2 + $0x1a8] sm:$0xff]
        %v469 = vld [vmem:[%s2 + $0x1b0] sm:$0xff]
        %v470 = vld [vmem:[%s2 + $0x1b8] sm:$0xff]
        %v471 = vld [vmem:[%s2 + $0x1c0] sm:$0xff]
        %v472 = vld [vmem:[%s2 + $0x1c8] sm:$0xff]
        %v473 = vld [vmem:[%s2 + $0x1d0] sm:$0xff]
        %v474 = vld [vmem:[%s2 + $0x1d8] sm:$0xff]
        %v475 = vld [vmem:[%s2 + $0x1e0] sm:$0xff]
        %v476 = vld [vmem:[%s2 + $0x1e8] sm:$0xff]
        %v477 = vld [vmem:[%s2 + $0x1f0] sm:$0xff]
        %v478 = vld [vmem:[%s2 + $0x1f8] sm:$0xff]
        %480 = vset.pattern.permute.xlu0 0
        %481 = vperm.xlu0 %480, %v415
        %v482 = vpop.permute.xlu0 %481
        %485 = vset.pattern.permute.xlu0 0
        %486 = vperm.xlu0 %485, %v416
        %v487 = vpop.permute.xlu0 %486
        %490 = vset.pattern.permute.xlu0 0
        %491 = vperm.xlu0 %490, %v417
        %v492 = vpop.permute.xlu0 %491
        %495 = vset.pattern.permute.xlu0 0
        %496 = vperm.xlu0 %495, %v418
        %v497 = vpop.permute.xlu0 %496
        %500 = vset.pattern.permute.xlu0 0
        %501 = vperm.xlu0 %500, %v419
        %v502 = vpop.permute.xlu0 %501
        %505 = vset.pattern.permute.xlu0 0
        %506 = vperm.xlu0 %505, %v420
        %v507 = vpop.permute.xlu0 %506
        %510 = vset.pattern.permute.xlu0 0
        %511 = vperm.xlu0 %510, %v421
        %v512 = vpop.permute.xlu0 %511
        %515 = vset.pattern.permute.xlu0 0
        %516 = vperm.xlu0 %515, %v422
        %v517 = vpop.permute.xlu0 %516
        %520 = vset.pattern.permute.xlu0 0
        %521 = vperm.xlu0 %520, %v423
        %v522 = vpop.permute.xlu0 %521
        %525 = vset.pattern.permute.xlu0 0
        %526 = vperm.xlu0 %525, %v424
        %v527 = vpop.permute.xlu0 %526
        %530 = vset.pattern.permute.xlu0 0
        %531 = vperm.xlu0 %530, %v425
        %v532 = vpop.permute.xlu0 %531
        %535 = vset.pattern.permute.xlu0 0
        %536 = vperm.xlu0 %535, %v426
        %v537 = vpop.permute.xlu0 %536
        %540 = vset.pattern.permute.xlu0 0
        %541 = vperm.xlu0 %540, %v427
        %v542 = vpop.permute.xlu0 %541
        %545 = vset.pattern.permute.xlu0 0
        %546 = vperm.xlu0 %545, %v428
        %v547 = vpop.permute.xlu0 %546
        %550 = vset.pattern.permute.xlu0 0
        %551 = vperm.xlu0 %550, %v429
        %v552 = vpop.permute.xlu0 %551
        %555 = vset.pattern.permute.xlu0 0
        %556 = vperm.xlu0 %555, %v430
        %v557 = vpop.permute.xlu0 %556
        %560 = vset.pattern.permute.xlu0 0
        %561 = vperm.xlu0 %560, %v431
        %v562 = vpop.permute.xlu0 %561
        %565 = vset.pattern.permute.xlu0 0
        %566 = vperm.xlu0 %565, %v432
        %v567 = vpop.permute.xlu0 %566
        %570 = vset.pattern.permute.xlu0 0
        %571 = vperm.xlu0 %570, %v433
        %v572 = vpop.permute.xlu0 %571
        %575 = vset.pattern.permute.xlu0 0
        %576 = vperm.xlu0 %575, %v434
        %v577 = vpop.permute.xlu0 %576
        %580 = vset.pattern.permute.xlu0 0
        %581 = vperm.xlu0 %580, %v435
        %v582 = vpop.permute.xlu0 %581
        %585 = vset.pattern.permute.xlu0 0
        %586 = vperm.xlu0 %585, %v436
        %v587 = vpop.permute.xlu0 %586
        %590 = vset.pattern.permute.xlu0 0
        %591 = vperm.xlu0 %590, %v437
        %v592 = vpop.permute.xlu0 %591
        %595 = vset.pattern.permute.xlu0 0
        %596 = vperm.xlu0 %595, %v438
        %v597 = vpop.permute.xlu0 %596
        %600 = vset.pattern.permute.xlu0 0
        %601 = vperm.xlu0 %600, %v439
        %v602 = vpop.permute.xlu0 %601
        %605 = vset.pattern.permute.xlu0 0
        %606 = vperm.xlu0 %605, %v440
        %v607 = vpop.permute.xlu0 %606
        %610 = vset.pattern.permute.xlu0 0
        %611 = vperm.xlu0 %610, %v441
        %v612 = vpop.permute.xlu0 %611
        %615 = vset.pattern.permute.xlu0 0
        %616 = vperm.xlu0 %615, %v442
        %v617 = vpop.permute.xlu0 %616
        %620 = vset.pattern.permute.xlu0 0
        %621 = vperm.xlu0 %620, %v443
        %v622 = vpop.permute.xlu0 %621
        %625 = vset.pattern.permute.xlu0 0
        %626 = vperm.xlu0 %625, %v444
        %v627 = vpop.permute.xlu0 %626
        %630 = vset.pattern.permute.xlu0 0
        %631 = vperm.xlu0 %630, %v445
        %v632 = vpop.permute.xlu0 %631
        %635 = vset.pattern.permute.xlu0 0
        %636 = vperm.xlu0 %635, %v446
        %v637 = vpop.permute.xlu0 %636
        %640 = vset.pattern.permute.xlu0 0
        %641 = vperm.xlu0 %640, %v447
        %v642 = vpop.permute.xlu0 %641
        %645 = vset.pattern.permute.xlu0 0
        %646 = vperm.xlu0 %645, %v448
        %v647 = vpop.permute.xlu0 %646
        %650 = vset.pattern.permute.xlu0 0
        %651 = vperm.xlu0 %650, %v449
        %v652 = vpop.permute.xlu0 %651
        %655 = vset.pattern.permute.xlu0 0
        %656 = vperm.xlu0 %655, %v450
        %v657 = vpop.permute.xlu0 %656
        %660 = vset.pattern.permute.xlu0 0
        %661 = vperm.xlu0 %660, %v451
        %v662 = vpop.permute.xlu0 %661
        %665 = vset.pattern.permute.xlu0 0
        %666 = vperm.xlu0 %665, %v452
        %v667 = vpop.permute.xlu0 %666
        %670 = vset.pattern.permute.xlu0 0
        %671 = vperm.xlu0 %670, %v453
        %v672 = vpop.permute.xlu0 %671
        %675 = vset.pattern.permute.xlu0 0
        %676 = vperm.xlu0 %675, %v454
        %v677 = vpop.permute.xlu0 %676
        %680 = vset.pattern.permute.xlu0 0
        %681 = vperm.xlu0 %680, %v455
        %v682 = vpop.permute.xlu0 %681
        %685 = vset.pattern.permute.xlu0 0
        %686 = vperm.xlu0 %685, %v456
        %v687 = vpop.permute.xlu0 %686
        %690 = vset.pattern.permute.xlu0 0
        %691 = vperm.xlu0 %690, %v457
        %v692 = vpop.permute.xlu0 %691
        %695 = vset.pattern.permute.xlu0 0
        %696 = vperm.xlu0 %695, %v458
        %v697 = vpop.permute.xlu0 %696
        %700 = vset.pattern.permute.xlu0 0
        %701 = vperm.xlu0 %700, %v459
        %v702 = vpop.permute.xlu0 %701
        %705 = vset.pattern.permute.xlu0 0
        %706 = vperm.xlu0 %705, %v460
        %v707 = vpop.permute.xlu0 %706
        %710 = vset.pattern.permute.xlu0 0
        %711 = vperm.xlu0 %710, %v461
        %v712 = vpop.permute.xlu0 %711
        %715 = vset.pattern.permute.xlu0 0
        %716 = vperm.xlu0 %715, %v462
        %v717 = vpop.permute.xlu0 %716
        %720 = vset.pattern.permute.xlu0 0
        %721 = vperm.xlu0 %720, %v463
        %v722 = vpop.permute.xlu0 %721
        %725 = vset.pattern.permute.xlu0 0
        %726 = vperm.xlu0 %725, %v464
        %v727 = vpop.permute.xlu0 %726
        %730 = vset.pattern.permute.xlu0 0
        %731 = vperm.xlu0 %730, %v465
        %v732 = vpop.permute.xlu0 %731
        %735 = vset.pattern.permute.xlu0 0
        %736 = vperm.xlu0 %735, %v466
        %v737 = vpop.permute.xlu0 %736
        %740 = vset.pattern.permute.xlu0 0
        %741 = vperm.xlu0 %740, %v467
        %v742 = vpop.permute.xlu0 %741
        %745 = vset.pattern.permute.xlu0 0
        %746 = vperm.xlu0 %745, %v468
        %v747 = vpop.permute.xlu0 %746
        %750 = vset.pattern.permute.xlu0 0
        %751 = vperm.xlu0 %750, %v469
        %v752 = vpop.permute.xlu0 %751
        %755 = vset.pattern.permute.xlu0 0
        %756 = vperm.xlu0 %755, %v470
        %v757 = vpop.permute.xlu0 %756
        %760 = vset.pattern.permute.xlu0 0
        %761 = vperm.xlu0 %760, %v471
        %v762 = vpop.permute.xlu0 %761
        %765 = vset.pattern.permute.xlu0 0
        %766 = vperm.xlu0 %765, %v472
        %v767 = vpop.permute.xlu0 %766
        %770 = vset.pattern.permute.xlu0 0
        %771 = vperm.xlu0 %770, %v473
        %v772 = vpop.permute.xlu0 %771
        %775 = vset.pattern.permute.xlu0 0
        %776 = vperm.xlu0 %775, %v474
        %v777 = vpop.permute.xlu0 %776
        %780 = vset.pattern.permute.xlu0 0
        %781 = vperm.xlu0 %780, %v475
        %v782 = vpop.permute.xlu0 %781
        %785 = vset.pattern.permute.xlu0 0
        %786 = vperm.xlu0 %785, %v476
        %v787 = vpop.permute.xlu0 %786
        %790 = vset.pattern.permute.xlu0 0
        %791 = vperm.xlu0 %790, %v477
        %v792 = vpop.permute.xlu0 %791
        %795 = vset.pattern.permute.xlu0 0
        %796 = vperm.xlu0 %795, %v478
        %v797 = vpop.permute.xlu0 %796
        %v863 = vunpack.c.l.b16 %v343
        %v864 = vunpack.c.l.b16 %v344
        %v865 = vunpack.c.l.b16 %v345
        %v866 = vunpack.c.l.b16 %v346
        %v867 = vunpack.c.l.b16 %v347
        %v868 = vunpack.c.l.b16 %v348
        %v869 = vunpack.c.l.b16 %v349
        %v870 = vunpack.c.l.b16 %v350
        %v871 = vunpack.c.l.b16 %v351
        %v872 = vunpack.c.l.b16 %v352
        %v873 = vunpack.c.l.b16 %v353
        %v874 = vunpack.c.l.b16 %v354
        %v875 = vunpack.c.l.b16 %v355
        %v876 = vunpack.c.l.b16 %v356
        %v877 = vunpack.c.l.b16 %v357
        %v878 = vunpack.c.l.b16 %v358
        %v879 = vunpack.c.l.b16 %v359
        %v880 = vunpack.c.l.b16 %v360
        %v881 = vunpack.c.l.b16 %v361
        %v882 = vunpack.c.l.b16 %v362
        %v883 = vunpack.c.l.b16 %v363
        %v884 = vunpack.c.l.b16 %v364
        %v885 = vunpack.c.l.b16 %v365
        %v886 = vunpack.c.l.b16 %v366
        %v887 = vunpack.c.l.b16 %v367
        %v888 = vunpack.c.l.b16 %v368
        %v889 = vunpack.c.l.b16 %v369
        %v890 = vunpack.c.l.b16 %v370
        %v891 = vunpack.c.l.b16 %v371
        %v892 = vunpack.c.l.b16 %v372
        %v893 = vunpack.c.l.b16 %v373
        %v894 = vunpack.c.l.b16 %v374
        %v895 = vunpack.c.l.b16 %v375
        %v896 = vunpack.c.l.b16 %v376
        %v897 = vunpack.c.l.b16 %v377
        %v898 = vunpack.c.l.b16 %v378
        %v899 = vunpack.c.l.b16 %v379
        %v900 = vunpack.c.l.b16 %v380
        %v901 = vunpack.c.l.b16 %v381
        %v902 = vunpack.c.l.b16 %v382
        %v903 = vunpack.c.l.b16 %v383
        %v904 = vunpack.c.l.b16 %v384
        %v905 = vunpack.c.l.b16 %v385
        %v906 = vunpack.c.l.b16 %v386
        %v907 = vunpack.c.l.b16 %v387
        %v908 = vunpack.c.l.b16 %v388
        %v909 = vunpack.c.l.b16 %v389
        %v910 = vunpack.c.l.b16 %v390
        %v911 = vunpack.c.l.b16 %v391
        %v912 = vunpack.c.l.b16 %v392
        %v913 = vunpack.c.l.b16 %v393
        %v914 = vunpack.c.l.b16 %v394
        %v915 = vunpack.c.l.b16 %v395
        %v916 = vunpack.c.l.b16 %v396
        %v917 = vunpack.c.l.b16 %v397
        %v918 = vunpack.c.l.b16 %v398
        %v919 = vunpack.c.l.b16 %v399
        %v920 = vunpack.c.l.b16 %v400
        %v921 = vunpack.c.l.b16 %v401
        %v922 = vunpack.c.l.b16 %v402
        %v923 = vunpack.c.l.b16 %v403
        %v924 = vunpack.c.l.b16 %v404
        %v925 = vunpack.c.l.b16 %v405
        %v926 = vunpack.c.l.b16 %v406
        %v927 = vpack.c.b16 %v864, %v863
        %v928 = vpack.c.b16 %v866, %v865
        %v929 = vpack.c.b16 %v868, %v867
        %v930 = vpack.c.b16 %v870, %v869
        %v931 = vpack.c.b16 %v872, %v871
        %v932 = vpack.c.b16 %v874, %v873
        %v933 = vpack.c.b16 %v876, %v875
        %v934 = vpack.c.b16 %v878, %v877
        %v935 = vpack.c.b16 %v880, %v879
        %v936 = vpack.c.b16 %v882, %v881
        %v937 = vpack.c.b16 %v884, %v883
        %v938 = vpack.c.b16 %v886, %v885
        %v939 = vpack.c.b16 %v888, %v887
        %v940 = vpack.c.b16 %v890, %v889
        %v941 = vpack.c.b16 %v892, %v891
        %v942 = vpack.c.b16 %v894, %v893
        %v943 = vpack.c.b16 %v896, %v895
        %v944 = vpack.c.b16 %v898, %v897
        %v945 = vpack.c.b16 %v900, %v899
        %v946 = vpack.c.b16 %v902, %v901
        %v947 = vpack.c.b16 %v904, %v903
        %v948 = vpack.c.b16 %v906, %v905
        %v949 = vpack.c.b16 %v908, %v907
        %v950 = vpack.c.b16 %v910, %v909
        %v951 = vpack.c.b16 %v912, %v911
        %v952 = vpack.c.b16 %v914, %v913
        %v953 = vpack.c.b16 %v916, %v915
        %v954 = vpack.c.b16 %v918, %v917
        %v955 = vpack.c.b16 %v920, %v919
        %v956 = vpack.c.b16 %v922, %v921
        %v957 = vpack.c.b16 %v924, %v923
        %v958 = vpack.c.b16 %v926, %v925
        %v967 = vunpack.c.l.b16 %v407
        %v968 = vunpack.c.h.b16 %v407
        %v969 = vunpack.c.l.b16 %v408
        %v970 = vunpack.c.h.b16 %v408
        %v971 = vunpack.c.l.b16 %v409
        %v972 = vunpack.c.h.b16 %v409
        %v973 = vunpack.c.l.b16 %v410
        %v974 = vunpack.c.h.b16 %v410
        %v975 = vunpack.c.l.b16 %v411
        %v976 = vunpack.c.h.b16 %v411
        %v977 = vunpack.c.l.b16 %v412
        %v978 = vunpack.c.h.b16 %v412
        %v979 = vunpack.c.l.b16 %v413
        %v980 = vunpack.c.h.b16 %v413
        %v981 = vunpack.c.l.b16 %v414
        %v982 = vunpack.c.h.b16 %v414
        %v983 = vpack.c.b16 %v969, %v967
        %v984 = vpack.c.b16 %v970, %v968
        %v985 = vpack.c.b16 %v973, %v971
        %v986 = vpack.c.b16 %v974, %v972
        %v987 = vpack.c.b16 %v977, %v975
        %v988 = vpack.c.b16 %v978, %v976
        %v989 = vpack.c.b16 %v981, %v979
        %v990 = vpack.c.b16 %v982, %v980
        %vm999 = vcmask 523264
        %v1001 = vsel %vm999, %v927, 0
        %v1004 = vsel %vm999, %v928, 0
        %v1007 = vsel %vm999, %v929, 0
        %v1010 = vsel %vm999, %v930, 0
        %v1013 = vsel %vm999, %v931, 0
        %v1016 = vsel %vm999, %v932, 0
        %v1019 = vsel %vm999, %v933, 0
        %v1022 = vsel %vm999, %v934, 0
        %v1025 = vsel %vm999, %v935, 0
        %v1028 = vsel %vm999, %v936, 0
        %v1031 = vsel %vm999, %v937, 0
        %v1034 = vsel %vm999, %v938, 0
        %v1037 = vsel %vm999, %v939, 0
        %v1040 = vsel %vm999, %v940, 0
        %v1043 = vsel %vm999, %v941, 0
        %v1046 = vsel %vm999, %v942, 0
        %v1049 = vsel %vm999, %v943, 0
        %v1052 = vsel %vm999, %v944, 0
        %v1055 = vsel %vm999, %v945, 0
        %v1058 = vsel %vm999, %v946, 0
        %v1061 = vsel %vm999, %v947, 0
        %v1064 = vsel %vm999, %v948, 0
        %v1067 = vsel %vm999, %v949, 0
        %v1070 = vsel %vm999, %v950, 0
        %v1073 = vsel %vm999, %v951, 0
        %v1076 = vsel %vm999, %v952, 0
        %v1079 = vsel %vm999, %v953, 0
        %v1082 = vsel %vm999, %v954, 0
        %v1085 = vsel %vm999, %v955, 0
        %v1088 = vsel %vm999, %v956, 0
        %v1091 = vsel %vm999, %v957, 0
        %v1094 = vsel %vm999, %v958, 0
        %1096 = vmatprep.subr.bf16.mxu0 %v984
        %1097 = vmatpush1.bf16.msra.mxu0 %v983
        %1098 = vmatprep.subr.bf16.mxu0 %v986
        %1099 = vmatpush1.bf16.msra.mxu0 %v985
        %1100 = vmatprep.subr.bf16.mxu0 %v988
        %1101 = vmatpush1.bf16.msra.mxu0 %v987
        %1102 = vmatprep.subr.bf16.mxu0 %v990
        %1103 = vmatpush1.bf16.msra.mxu0 %v989
        %1104 = vmatprep.subr.bf16.mxu0 0
        %1105 = vmatpush1.bf16.msra.mxu0 0
        %1106 = vmatprep.subr.bf16.mxu0 0
        %1107 = vmatpush1.bf16.msra.mxu0 0
        %1108 = vmatprep.subr.bf16.mxu0 0
        %1109 = vmatpush1.bf16.msra.mxu0 0
        %1110 = vmatprep.subr.bf16.mxu0 0
        %1111 = vmatpush1.bf16.msra.mxu0 0
        %1112 = vmatprep.subr.bf16.mxu0 0
        %1113 = vmatpush1.bf16.msra.mxu0 0
        %1114 = vmatprep.subr.bf16.mxu0 0
        %1115 = vmatpush1.bf16.msra.mxu0 0
        %1116 = vmatprep.subr.bf16.mxu0 0
        %1117 = vmatpush1.bf16.msra.mxu0 0
        %1118 = vmatprep.subr.bf16.mxu0 0
        %1119 = vmatpush1.bf16.msra.mxu0 0
        %1120 = vmatprep.subr.bf16.mxu0 0
        %1121 = vmatpush1.bf16.msra.mxu0 0
        %1122 = vmatprep.subr.bf16.mxu0 0
        %1123 = vmatpush1.bf16.msra.mxu0 0
        %1124 = vmatprep.subr.bf16.mxu0 0
        %1125 = vmatpush1.bf16.msra.mxu0 0
        %1126 = vmatprep.subr.bf16.mxu0 0
        %1127 = vmatpush1.bf16.msra.mxu0 0
        %1128 = vmatprep.mubr.bf16.mxu0 0
        %1129 = vmatmul.mubr.bf16.gmra.mrb[0].mxu0 %v1001
        %v1130 = vpop.f32.mrb[0].mxu0
        %v1131 = vadd.f32 %v482, %v1130
        %v1132 = vpop.f32.mrb[0].mxu0
        %v1133 = vadd.f32 %v482, %v1132
        %v1134 = vpop.f32.mrb[0].mxu0
        %v1135 = vadd.f32 %v487, %v1134
        %v1136 = vpop.f32.mrb[0].mxu0
        %v1137 = vadd.f32 %v487, %v1136
        %1138 = vmatprep.mubr.bf16.mxu0 0
        %1139 = vmatmul.mubr.bf16.gmra.mrb[0].mxu0 %v1004
        %v1140 = vpop.f32.mrb[0].mxu0
        %v1141 = vadd.f32 %v492, %v1140
        %v1142 = vpop.f32.mrb[0].mxu0
        %v1143 = vadd.f32 %v492, %v1142
        %v1144 = vpop.f32.mrb[0].mxu0
        %v1145 = vadd.f32 %v497, %v1144
        %v1146 = vpop.f32.mrb[0].mxu0
        %v1147 = vadd.f32 %v497, %v1146
        %1148 = vmatprep.mubr.bf16.mxu0 0
        %1149 = vmatmul.mubr.bf16.gmra.mrb[0].mxu0 %v1007
        %v1150 = vpop.f32.mrb[0].mxu0
        %v1151 = vadd.f32 %v502, %v1150
        %v1152 = vpop.f32.mrb[0].mxu0
        %v1153 = vadd.f32 %v502, %v1152
        %v1154 = vpop.f32.mrb[0].mxu0
        %v1155 = vadd.f32 %v507, %v1154
        %v1156 = vpop.f32.mrb[0].mxu0
        %v1157 = vadd.f32 %v507, %v1156
        %1158 = vmatprep.mubr.bf16.mxu0 0
        %1159 = vmatmul.mubr.bf16.gmra.mrb[0].mxu0 %v1010
        %v1160 = vpop.f32.mrb[0].mxu0
        %v1161 = vadd.f32 %v512, %v1160
        %v1162 = vpop.f32.mrb[0].mxu0
        %v1163 = vadd.f32 %v512, %v1162
        %v1164 = vpop.f32.mrb[0].mxu0
        %v1165 = vadd.f32 %v517, %v1164
        %v1166 = vpop.f32.mrb[0].mxu0
        %v1167 = vadd.f32 %v517, %v1166
        %1168 = vmatprep.mubr.bf16.mxu0 0
        %1169 = vmatmul.mubr.bf16.gmra.mrb[0].mxu0 %v1013
        %v1170 = vpop.f32.mrb[0].mxu0
        %v1171 = vadd.f32 %v522, %v1170
        %v1172 = vpop.f32.mrb[0].mxu0
        %v1173 = vadd.f32 %v522, %v1172
        %v1174 = vpop.f32.mrb[0].mxu0
        %v1175 = vadd.f32 %v527, %v1174
        %v1176 = vpop.f32.mrb[0].mxu0
        %v1177 = vadd.f32 %v527, %v1176
        %1178 = vmatprep.mubr.bf16.mxu0 0
        %1179 = vmatmul.mubr.bf16.gmra.mrb[0].mxu0 %v1016
        %v1180 = vpop.f32.mrb[0].mxu0
        %v1181 = vadd.f32 %v532, %v1180
        %v1182 = vpop.f32.mrb[0].mxu0
        %v1183 = vadd.f32 %v532, %v1182
        %v1184 = vpop.f32.mrb[0].mxu0
        %v1185 = vadd.f32 %v537, %v1184
        %v1186 = vpop.f32.mrb[0].mxu0
        %v1187 = vadd.f32 %v537, %v1186
        %1188 = vmatprep.mubr.bf16.mxu0 0
        %1189 = vmatmul.mubr.bf16.gmra.mrb[0].mxu0 %v1019
        %v1190 = vpop.f32.mrb[0].mxu0
        %v1191 = vadd.f32 %v542, %v1190
        %v1192 = vpop.f32.mrb[0].mxu0
        %v1193 = vadd.f32 %v542, %v1192
        %v1194 = vpop.f32.mrb[0].mxu0
        %v1195 = vadd.f32 %v547, %v1194
        %v1196 = vpop.f32.mrb[0].mxu0
        %v1197 = vadd.f32 %v547, %v1196
        %1198 = vmatprep.mubr.bf16.mxu0 0
        %1199 = vmatmul.mubr.bf16.gmra.mrb[0].mxu0 %v1022
        %v1200 = vpop.f32.mrb[0].mxu0
        %v1201 = vadd.f32 %v552, %v1200
        %v1202 = vpop.f32.mrb[0].mxu0
        %v1203 = vadd.f32 %v552, %v1202
        %v1204 = vpop.f32.mrb[0].mxu0
        %v1205 = vadd.f32 %v557, %v1204
        %v1206 = vpop.f32.mrb[0].mxu0
        %v1207 = vadd.f32 %v557, %v1206
        %1208 = vmatprep.mubr.bf16.mxu0 0
        %1209 = vmatmul.mubr.bf16.gmra.mrb[0].mxu0 %v1025
        %v1210 = vpop.f32.mrb[0].mxu0
        %v1211 = vadd.f32 %v562, %v1210
        %v1212 = vpop.f32.mrb[0].mxu0
        %v1213 = vadd.f32 %v562, %v1212
        %v1214 = vpop.f32.mrb[0].mxu0
        %v1215 = vadd.f32 %v567, %v1214
        %v1216 = vpop.f32.mrb[0].mxu0
        %v1217 = vadd.f32 %v567, %v1216
        %1218 = vmatprep.mubr.bf16.mxu0 0
        %1219 = vmatmul.mubr.bf16.gmra.mrb[0].mxu0 %v1028
        %v1220 = vpop.f32.mrb[0].mxu0
        %v1221 = vadd.f32 %v572, %v1220
        %v1222 = vpop.f32.mrb[0].mxu0
        %v1223 = vadd.f32 %v572, %v1222
        %v1224 = vpop.f32.mrb[0].mxu0
        %v1225 = vadd.f32 %v577, %v1224
        %v1226 = vpop.f32.mrb[0].mxu0
        %v1227 = vadd.f32 %v577, %v1226
        %1228 = vmatprep.mubr.bf16.mxu0 0
        %1229 = vmatmul.mubr.bf16.gmra.mrb[0].mxu0 %v1031
        %v1230 = vpop.f32.mrb[0].mxu0
        %v1231 = vadd.f32 %v582, %v1230
        %v1232 = vpop.f32.mrb[0].mxu0
        %v1233 = vadd.f32 %v582, %v1232
        %v1234 = vpop.f32.mrb[0].mxu0
        %v1235 = vadd.f32 %v587, %v1234
        %v1236 = vpop.f32.mrb[0].mxu0
        %v1237 = vadd.f32 %v587, %v1236
        %1238 = vmatprep.mubr.bf16.mxu0 0
        %1239 = vmatmul.mubr.bf16.gmra.mrb[0].mxu0 %v1034
        %v1240 = vpop.f32.mrb[0].mxu0
        %v1241 = vadd.f32 %v592, %v1240
        %v1242 = vpop.f32.mrb[0].mxu0
        %v1243 = vadd.f32 %v592, %v1242
        %v1244 = vpop.f32.mrb[0].mxu0
        %v1245 = vadd.f32 %v597, %v1244
        %v1246 = vpop.f32.mrb[0].mxu0
        %v1247 = vadd.f32 %v597, %v1246
        %1248 = vmatprep.mubr.bf16.mxu0 0
        %1249 = vmatmul.mubr.bf16.gmra.mrb[0].mxu0 %v1037
        %v1250 = vpop.f32.mrb[0].mxu0
        %v1251 = vadd.f32 %v602, %v1250
        %v1252 = vpop.f32.mrb[0].mxu0
        %v1253 = vadd.f32 %v602, %v1252
        %v1254 = vpop.f32.mrb[0].mxu0
        %v1255 = vadd.f32 %v607, %v1254
        %v1256 = vpop.f32.mrb[0].mxu0
        %v1257 = vadd.f32 %v607, %v1256
        %1258 = vmatprep.mubr.bf16.mxu0 0
        %1259 = vmatmul.mubr.bf16.gmra.mrb[0].mxu0 %v1040
        %v1260 = vpop.f32.mrb[0].mxu0
        %v1261 = vadd.f32 %v612, %v1260
        %v1262 = vpop.f32.mrb[0].mxu0
        %v1263 = vadd.f32 %v612, %v1262
        %v1264 = vpop.f32.mrb[0].mxu0
        %v1265 = vadd.f32 %v617, %v1264
        %v1266 = vpop.f32.mrb[0].mxu0
        %v1267 = vadd.f32 %v617, %v1266
        %1268 = vmatprep.mubr.bf16.mxu0 0
        %1269 = vmatmul.mubr.bf16.gmra.mrb[0].mxu0 %v1043
        %v1270 = vpop.f32.mrb[0].mxu0
        %v1271 = vadd.f32 %v622, %v1270
        %v1272 = vpop.f32.mrb[0].mxu0
        %v1273 = vadd.f32 %v622, %v1272
        %v1274 = vpop.f32.mrb[0].mxu0
        %v1275 = vadd.f32 %v627, %v1274
        %v1276 = vpop.f32.mrb[0].mxu0
        %v1277 = vadd.f32 %v627, %v1276
        %1278 = vmatprep.mubr.bf16.mxu0 0
        %1279 = vmatmul.mubr.bf16.gmra.mrb[0].mxu0 %v1046
        %v1280 = vpop.f32.mrb[0].mxu0
        %v1281 = vadd.f32 %v632, %v1280
        %v1282 = vpop.f32.mrb[0].mxu0
        %v1283 = vadd.f32 %v632, %v1282
        %v1284 = vpop.f32.mrb[0].mxu0
        %v1285 = vadd.f32 %v637, %v1284
        %v1286 = vpop.f32.mrb[0].mxu0
        %v1287 = vadd.f32 %v637, %v1286
        %1288 = vmatprep.mubr.bf16.mxu0 0
        %1289 = vmatmul.mubr.bf16.gmra.mrb[0].mxu0 %v1049
        %v1290 = vpop.f32.mrb[0].mxu0
        %v1291 = vadd.f32 %v642, %v1290
        %v1292 = vpop.f32.mrb[0].mxu0
        %v1293 = vadd.f32 %v642, %v1292
        %v1294 = vpop.f32.mrb[0].mxu0
        %v1295 = vadd.f32 %v647, %v1294
        %v1296 = vpop.f32.mrb[0].mxu0
        %v1297 = vadd.f32 %v647, %v1296
        %1298 = vmatprep.mubr.bf16.mxu0 0
        %1299 = vmatmul.mubr.bf16.gmra.mrb[0].mxu0 %v1052
        %v1300 = vpop.f32.mrb[0].mxu0
        %v1301 = vadd.f32 %v652, %v1300
        %v1302 = vpop.f32.mrb[0].mxu0
        %v1303 = vadd.f32 %v652, %v1302
        %v1304 = vpop.f32.mrb[0].mxu0
        %v1305 = vadd.f32 %v657, %v1304
        %v1306 = vpop.f32.mrb[0].mxu0
        %v1307 = vadd.f32 %v657, %v1306
        %1308 = vmatprep.mubr.bf16.mxu0 0
        %1309 = vmatmul.mubr.bf16.gmra.mrb[0].mxu0 %v1055
        %v1310 = vpop.f32.mrb[0].mxu0
        %v1311 = vadd.f32 %v662, %v1310
        %v1312 = vpop.f32.mrb[0].mxu0
        %v1313 = vadd.f32 %v662, %v1312
        %v1314 = vpop.f32.mrb[0].mxu0
        %v1315 = vadd.f32 %v667, %v1314
        %v1316 = vpop.f32.mrb[0].mxu0
        %v1317 = vadd.f32 %v667, %v1316
        %1318 = vmatprep.mubr.bf16.mxu0 0
        %1319 = vmatmul.mubr.bf16.gmra.mrb[0].mxu0 %v1058
        %v1320 = vpop.f32.mrb[0].mxu0
        %v1321 = vadd.f32 %v672, %v1320
        %v1322 = vpop.f32.mrb[0].mxu0
        %v1323 = vadd.f32 %v672, %v1322
        %v1324 = vpop.f32.mrb[0].mxu0
        %v1325 = vadd.f32 %v677, %v1324
        %v1326 = vpop.f32.mrb[0].mxu0
        %v1327 = vadd.f32 %v677, %v1326
        %1328 = vmatprep.mubr.bf16.mxu0 0
        %1329 = vmatmul.mubr.bf16.gmra.mrb[0].mxu0 %v1061
        %v1330 = vpop.f32.mrb[0].mxu0
        %v1331 = vadd.f32 %v682, %v1330
        %v1332 = vpop.f32.mrb[0].mxu0
        %v1333 = vadd.f32 %v682, %v1332
        %v1334 = vpop.f32.mrb[0].mxu0
        %v1335 = vadd.f32 %v687, %v1334
        %v1336 = vpop.f32.mrb[0].mxu0
        %v1337 = vadd.f32 %v687, %v1336
        %1338 = vmatprep.mubr.bf16.mxu0 0
        %1339 = vmatmul.mubr.bf16.gmra.mrb[0].mxu0 %v1064
        %v1340 = vpop.f32.mrb[0].mxu0
        %v1341 = vadd.f32 %v692, %v1340
        %v1342 = vpop.f32.mrb[0].mxu0
        %v1343 = vadd.f32 %v692, %v1342
        %v1344 = vpop.f32.mrb[0].mxu0
        %v1345 = vadd.f32 %v697, %v1344
        %v1346 = vpop.f32.mrb[0].mxu0
        %v1347 = vadd.f32 %v697, %v1346
        %1348 = vmatprep.mubr.bf16.mxu0 0
        %1349 = vmatmul.mubr.bf16.gmra.mrb[0].mxu0 %v1067
        %v1350 = vpop.f32.mrb[0].mxu0
        %v1351 = vadd.f32 %v702, %v1350
        %v1352 = vpop.f32.mrb[0].mxu0
        %v1353 = vadd.f32 %v702, %v1352
        %v1354 = vpop.f32.mrb[0].mxu0
        %v1355 = vadd.f32 %v707, %v1354
        %v1356 = vpop.f32.mrb[0].mxu0
        %v1357 = vadd.f32 %v707, %v1356
        %1358 = vmatprep.mubr.bf16.mxu0 0
        %1359 = vmatmul.mubr.bf16.gmra.mrb[0].mxu0 %v1070
        %v1360 = vpop.f32.mrb[0].mxu0
        %v1361 = vadd.f32 %v712, %v1360
        %v1362 = vpop.f32.mrb[0].mxu0
        %v1363 = vadd.f32 %v712, %v1362
        %v1364 = vpop.f32.mrb[0].mxu0
        %v1365 = vadd.f32 %v717, %v1364
        %v1366 = vpop.f32.mrb[0].mxu0
        %v1367 = vadd.f32 %v717, %v1366
        %1368 = vmatprep.mubr.bf16.mxu0 0
        %1369 = vmatmul.mubr.bf16.gmra.mrb[0].mxu0 %v1073
        %v1370 = vpop.f32.mrb[0].mxu0
        %v1371 = vadd.f32 %v722, %v1370
        %v1372 = vpop.f32.mrb[0].mxu0
        %v1373 = vadd.f32 %v722, %v1372
        %v1374 = vpop.f32.mrb[0].mxu0
        %v1375 = vadd.f32 %v727, %v1374
        %v1376 = vpop.f32.mrb[0].mxu0
        %v1377 = vadd.f32 %v727, %v1376
        %1378 = vmatprep.mubr.bf16.mxu0 0
        %1379 = vmatmul.mubr.bf16.gmra.mrb[0].mxu0 %v1076
        %v1380 = vpop.f32.mrb[0].mxu0
        %v1381 = vadd.f32 %v732, %v1380
        %v1382 = vpop.f32.mrb[0].mxu0
        %v1383 = vadd.f32 %v732, %v1382
        %v1384 = vpop.f32.mrb[0].mxu0
        %v1385 = vadd.f32 %v737, %v1384
        %v1386 = vpop.f32.mrb[0].mxu0
        %v1387 = vadd.f32 %v737, %v1386
        %1388 = vmatprep.mubr.bf16.mxu0 0
        %1389 = vmatmul.mubr.bf16.gmra.mrb[0].mxu0 %v1079
        %v1390 = vpop.f32.mrb[0].mxu0
        %v1391 = vadd.f32 %v742, %v1390
        %v1392 = vpop.f32.mrb[0].mxu0
        %v1393 = vadd.f32 %v742, %v1392
        %v1394 = vpop.f32.mrb[0].mxu0
        %v1395 = vadd.f32 %v747, %v1394
        %v1396 = vpop.f32.mrb[0].mxu0
        %v1397 = vadd.f32 %v747, %v1396
        %1398 = vmatprep.mubr.bf16.mxu0 0
        %1399 = vmatmul.mubr.bf16.gmra.mrb[0].mxu0 %v1082
        %v1400 = vpop.f32.mrb[0].mxu0
        %v1401 = vadd.f32 %v752, %v1400
        %v1402 = vpop.f32.mrb[0].mxu0
        %v1403 = vadd.f32 %v752, %v1402
        %v1404 = vpop.f32.mrb[0].mxu0
        %v1405 = vadd.f32 %v757, %v1404
        %v1406 = vpop.f32.mrb[0].mxu0
        %v1407 = vadd.f32 %v757, %v1406
        %1408 = vmatprep.mubr.bf16.mxu0 0
        %1409 = vmatmul.mubr.bf16.gmra.mrb[0].mxu0 %v1085
        %v1410 = vpop.f32.mrb[0].mxu0
        %v1411 = vadd.f32 %v762, %v1410
        %v1412 = vpop.f32.mrb[0].mxu0
        %v1413 = vadd.f32 %v762, %v1412
        %v1414 = vpop.f32.mrb[0].mxu0
        %v1415 = vadd.f32 %v767, %v1414
        %v1416 = vpop.f32.mrb[0].mxu0
        %v1417 = vadd.f32 %v767, %v1416
        %1418 = vmatprep.mubr.bf16.mxu0 0
        %1419 = vmatmul.mubr.bf16.gmra.mrb[0].mxu0 %v1088
        %v1420 = vpop.f32.mrb[0].mxu0
        %v1421 = vadd.f32 %v772, %v1420
        %v1422 = vpop.f32.mrb[0].mxu0
        %v1423 = vadd.f32 %v772, %v1422
        %v1424 = vpop.f32.mrb[0].mxu0
        %v1425 = vadd.f32 %v777, %v1424
        %v1426 = vpop.f32.mrb[0].mxu0
        %v1427 = vadd.f32 %v777, %v1426
        %1428 = vmatprep.mubr.bf16.mxu0 0
        %1429 = vmatmul.mubr.bf16.gmra.mrb[0].mxu0 %v1091
        %v1430 = vpop.f32.mrb[0].mxu0
        %v1431 = vadd.f32 %v782, %v1430
        %v1432 = vpop.f32.mrb[0].mxu0
        %v1433 = vadd.f32 %v782, %v1432
        %v1434 = vpop.f32.mrb[0].mxu0
        %v1435 = vadd.f32 %v787, %v1434
        %v1436 = vpop.f32.mrb[0].mxu0
        %v1437 = vadd.f32 %v787, %v1436
        %1438 = vmatprep.mubr.bf16.mxu0 0
        %1439 = vmatmul.mubr.bf16.gmra.mrb[0].mxu0 %v1094
        %v1440 = vpop.f32.mrb[0].mxu0
        %v1441 = vadd.f32 %v792, %v1440
        %v1442 = vpop.f32.mrb[0].mxu0
        %v1443 = vadd.f32 %v792, %v1442
        %v1444 = vpop.f32.mrb[0].mxu0
        %v1445 = vadd.f32 %v797, %v1444
        %v1446 = vpop.f32.mrb[0].mxu0
        %v1447 = vadd.f32 %v797, %v1446
        %1448 = vdwg.mxu0
        %v1449 = vmul.f32 %v1131, 0.2
        %v1450 = vmul.f32 %v1133, 0.2
        %v1451 = vmul.f32 %v1135, 0.2
        %v1452 = vmul.f32 %v1137, 0.2
        %v1453 = vmul.f32 %v1141, 0.2
        %v1454 = vmul.f32 %v1143, 0.2
        %v1455 = vmul.f32 %v1145, 0.2
        %v1456 = vmul.f32 %v1147, 0.2
        %v1457 = vmul.f32 %v1151, 0.2
        %v1458 = vmul.f32 %v1153, 0.2
        %v1459 = vmul.f32 %v1155, 0.2
        %v1460 = vmul.f32 %v1157, 0.2
        %v1461 = vmul.f32 %v1161, 0.2
        %v1462 = vmul.f32 %v1163, 0.2
        %v1463 = vmul.f32 %v1165, 0.2
        %v1464 = vmul.f32 %v1167, 0.2
        %v1465 = vmul.f32 %v1171, 0.2
        %v1466 = vmul.f32 %v1173, 0.2
        %v1467 = vmul.f32 %v1175, 0.2
        %v1468 = vmul.f32 %v1177, 0.2
        %v1469 = vmul.f32 %v1181, 0.2
        %v1470 = vmul.f32 %v1183, 0.2
        %v1471 = vmul.f32 %v1185, 0.2
        %v1472 = vmul.f32 %v1187, 0.2
        %v1473 = vmul.f32 %v1191, 0.2
        %v1474 = vmul.f32 %v1193, 0.2
        %v1475 = vmul.f32 %v1195, 0.2
        %v1476 = vmul.f32 %v1197, 0.2
        %v1477 = vmul.f32 %v1201, 0.2
        %v1478 = vmul.f32 %v1203, 0.2
        %v1479 = vmul.f32 %v1205, 0.2
        %v1480 = vmul.f32 %v1207, 0.2
        %v1481 = vmul.f32 %v1211, 0.2
        %v1482 = vmul.f32 %v1213, 0.2
        %v1483 = vmul.f32 %v1215, 0.2
        %v1484 = vmul.f32 %v1217, 0.2
        %v1485 = vmul.f32 %v1221, 0.2
        %v1486 = vmul.f32 %v1223, 0.2
        %v1487 = vmul.f32 %v1225, 0.2
        %v1488 = vmul.f32 %v1227, 0.2
        %v1489 = vmul.f32 %v1231, 0.2
        %v1490 = vmul.f32 %v1233, 0.2
        %v1491 = vmul.f32 %v1235, 0.2
        %v1492 = vmul.f32 %v1237, 0.2
        %v1493 = vmul.f32 %v1241, 0.2
        %v1494 = vmul.f32 %v1243, 0.2
        %v1495 = vmul.f32 %v1245, 0.2
        %v1496 = vmul.f32 %v1247, 0.2
        %v1497 = vmul.f32 %v1251, 0.2
        %v1498 = vmul.f32 %v1253, 0.2
        %v1499 = vmul.f32 %v1255, 0.2
        %v1500 = vmul.f32 %v1257, 0.2
        %v1501 = vmul.f32 %v1261, 0.2
        %v1502 = vmul.f32 %v1263, 0.2
        %v1503 = vmul.f32 %v1265, 0.2
        %v1504 = vmul.f32 %v1267, 0.2
        %v1505 = vmul.f32 %v1271, 0.2
        %v1506 = vmul.f32 %v1273, 0.2
        %v1507 = vmul.f32 %v1275, 0.2
        %v1508 = vmul.f32 %v1277, 0.2
        %v1509 = vmul.f32 %v1281, 0.2
        %v1510 = vmul.f32 %v1283, 0.2
        %v1511 = vmul.f32 %v1285, 0.2
        %v1512 = vmul.f32 %v1287, 0.2
        %v1513 = vmul.f32 %v1291, 0.2
        %v1514 = vmul.f32 %v1293, 0.2
        %v1515 = vmul.f32 %v1295, 0.2
        %v1516 = vmul.f32 %v1297, 0.2
        %v1517 = vmul.f32 %v1301, 0.2
        %v1518 = vmul.f32 %v1303, 0.2
        %v1519 = vmul.f32 %v1305, 0.2
        %v1520 = vmul.f32 %v1307, 0.2
        %v1521 = vmul.f32 %v1311, 0.2
        %v1522 = vmul.f32 %v1313, 0.2
        %v1523 = vmul.f32 %v1315, 0.2
        %v1524 = vmul.f32 %v1317, 0.2
        %v1525 = vmul.f32 %v1321, 0.2
        %v1526 = vmul.f32 %v1323, 0.2
        %v1527 = vmul.f32 %v1325, 0.2
        %v1528 = vmul.f32 %v1327, 0.2
        %v1529 = vmul.f32 %v1331, 0.2
        %v1530 = vmul.f32 %v1333, 0.2
        %v1531 = vmul.f32 %v1335, 0.2
        %v1532 = vmul.f32 %v1337, 0.2
        %v1533 = vmul.f32 %v1341, 0.2
        %v1534 = vmul.f32 %v1343, 0.2
        %v1535 = vmul.f32 %v1345, 0.2
        %v1536 = vmul.f32 %v1347, 0.2
        %v1537 = vmul.f32 %v1351, 0.2
        %v1538 = vmul.f32 %v1353, 0.2
        %v1539 = vmul.f32 %v1355, 0.2
        %v1540 = vmul.f32 %v1357, 0.2
        %v1541 = vmul.f32 %v1361, 0.2
        %v1542 = vmul.f32 %v1363, 0.2
        %v1543 = vmul.f32 %v1365, 0.2
        %v1544 = vmul.f32 %v1367, 0.2
        %v1545 = vmul.f32 %v1371, 0.2
        %v1546 = vmul.f32 %v1373, 0.2
        %v1547 = vmul.f32 %v1375, 0.2
        %v1548 = vmul.f32 %v1377, 0.2
        %v1549 = vmul.f32 %v1381, 0.2
        %v1550 = vmul.f32 %v1383, 0.2
        %v1551 = vmul.f32 %v1385, 0.2
        %v1552 = vmul.f32 %v1387, 0.2
        %v1553 = vmul.f32 %v1391, 0.2
        %v1554 = vmul.f32 %v1393, 0.2
        %v1555 = vmul.f32 %v1395, 0.2
        %v1556 = vmul.f32 %v1397, 0.2
        %v1557 = vmul.f32 %v1401, 0.2
        %v1558 = vmul.f32 %v1403, 0.2
        %v1559 = vmul.f32 %v1405, 0.2
        %v1560 = vmul.f32 %v1407, 0.2
        %v1561 = vmul.f32 %v1411, 0.2
        %v1562 = vmul.f32 %v1413, 0.2
        %v1563 = vmul.f32 %v1415, 0.2
        %v1564 = vmul.f32 %v1417, 0.2
        %v1565 = vmul.f32 %v1421, 0.2
        %v1566 = vmul.f32 %v1423, 0.2
        %v1567 = vmul.f32 %v1425, 0.2
        %v1568 = vmul.f32 %v1427, 0.2
        %v1569 = vmul.f32 %v1431, 0.2
        %v1570 = vmul.f32 %v1433, 0.2
        %v1571 = vmul.f32 %v1435, 0.2
        %v1572 = vmul.f32 %v1437, 0.2
        %v1573 = vmul.f32 %v1441, 0.2
        %v1574 = vmul.f32 %v1443, 0.2
        %v1575 = vmul.f32 %v1445, 0.2
        %v1576 = vmul.f32 %v1447, 0.2
        %v1577 = vmax.f32 %v1131, %v1449
        %v1578 = vmax.f32 %v1133, %v1450
        %v1579 = vmax.f32 %v1135, %v1451
        %v1580 = vmax.f32 %v1137, %v1452
        %v1581 = vmax.f32 %v1141, %v1453
        %v1582 = vmax.f32 %v1143, %v1454
        %v1583 = vmax.f32 %v1145, %v1455
        %v1584 = vmax.f32 %v1147, %v1456
        %v1585 = vmax.f32 %v1151, %v1457
        %v1586 = vmax.f32 %v1153, %v1458
        %v1587 = vmax.f32 %v1155, %v1459
        %v1588 = vmax.f32 %v1157, %v1460
        %v1589 = vmax.f32 %v1161, %v1461
        %v1590 = vmax.f32 %v1163, %v1462
        %v1591 = vmax.f32 %v1165, %v1463
        %v1592 = vmax.f32 %v1167, %v1464
        %v1593 = vmax.f32 %v1171, %v1465
        %v1594 = vmax.f32 %v1173, %v1466
        %v1595 = vmax.f32 %v1175, %v1467
        %v1596 = vmax.f32 %v1177, %v1468
        %v1597 = vmax.f32 %v1181, %v1469
        %v1598 = vmax.f32 %v1183, %v1470
        %v1599 = vmax.f32 %v1185, %v1471
        %v1600 = vmax.f32 %v1187, %v1472
        %v1601 = vmax.f32 %v1191, %v1473
        %v1602 = vmax.f32 %v1193, %v1474
        %v1603 = vmax.f32 %v1195, %v1475
        %v1604 = vmax.f32 %v1197, %v1476
        %v1605 = vmax.f32 %v1201, %v1477
        %v1606 = vmax.f32 %v1203, %v1478
        %v1607 = vmax.f32 %v1205, %v1479
        %v1608 = vmax.f32 %v1207, %v1480
        %v1609 = vmax.f32 %v1211, %v1481
        %v1610 = vmax.f32 %v1213, %v1482
        %v1611 = vmax.f32 %v1215, %v1483
        %v1612 = vmax.f32 %v1217, %v1484
        %v1613 = vmax.f32 %v1221, %v1485
        %v1614 = vmax.f32 %v1223, %v1486
        %v1615 = vmax.f32 %v1225, %v1487
        %v1616 = vmax.f32 %v1227, %v1488
        %v1617 = vmax.f32 %v1231, %v1489
        %v1618 = vmax.f32 %v1233, %v1490
        %v1619 = vmax.f32 %v1235, %v1491
        %v1620 = vmax.f32 %v1237, %v1492
        %v1621 = vmax.f32 %v1241, %v1493
        %v1622 = vmax.f32 %v1243, %v1494
        %v1623 = vmax.f32 %v1245, %v1495
        %v1624 = vmax.f32 %v1247, %v1496
        %v1625 = vmax.f32 %v1251, %v1497
        %v1626 = vmax.f32 %v1253, %v1498
        %v1627 = vmax.f32 %v1255, %v1499
        %v1628 = vmax.f32 %v1257, %v1500
        %v1629 = vmax.f32 %v1261, %v1501
        %v1630 = vmax.f32 %v1263, %v1502
        %v1631 = vmax.f32 %v1265, %v1503
        %v1632 = vmax.f32 %v1267, %v1504
        %v1633 = vmax.f32 %v1271, %v1505
        %v1634 = vmax.f32 %v1273, %v1506
        %v1635 = vmax.f32 %v1275, %v1507
        %v1636 = vmax.f32 %v1277, %v1508
        %v1637 = vmax.f32 %v1281, %v1509
        %v1638 = vmax.f32 %v1283, %v1510
        %v1639 = vmax.f32 %v1285, %v1511
        %v1640 = vmax.f32 %v1287, %v1512
        %v1641 = vmax.f32 %v1291, %v1513
        %v1642 = vmax.f32 %v1293, %v1514
        %v1643 = vmax.f32 %v1295, %v1515
        %v1644 = vmax.f32 %v1297, %v1516
        %v1645 = vmax.f32 %v1301, %v1517
        %v1646 = vmax.f32 %v1303, %v1518
        %v1647 = vmax.f32 %v1305, %v1519
        %v1648 = vmax.f32 %v1307, %v1520
        %v1649 = vmax.f32 %v1311, %v1521
        %v1650 = vmax.f32 %v1313, %v1522
        %v1651 = vmax.f32 %v1315, %v1523
        %v1652 = vmax.f32 %v1317, %v1524
        %v1653 = vmax.f32 %v1321, %v1525
        %v1654 = vmax.f32 %v1323, %v1526
        %v1655 = vmax.f32 %v1325, %v1527
        %v1656 = vmax.f32 %v1327, %v1528
        %v1657 = vmax.f32 %v1331, %v1529
        %v1658 = vmax.f32 %v1333, %v1530
        %v1659 = vmax.f32 %v1335, %v1531
        %v1660 = vmax.f32 %v1337, %v1532
        %v1661 = vmax.f32 %v1341, %v1533
        %v1662 = vmax.f32 %v1343, %v1534
        %v1663 = vmax.f32 %v1345, %v1535
        %v1664 = vmax.f32 %v1347, %v1536
        %v1665 = vmax.f32 %v1351, %v1537
        %v1666 = vmax.f32 %v1353, %v1538
        %v1667 = vmax.f32 %v1355, %v1539
        %v1668 = vmax.f32 %v1357, %v1540
        %v1669 = vmax.f32 %v1361, %v1541
        %v1670 = vmax.f32 %v1363, %v1542
        %v1671 = vmax.f32 %v1365, %v1543
        %v1672 = vmax.f32 %v1367, %v1544
        %v1673 = vmax.f32 %v1371, %v1545
        %v1674 = vmax.f32 %v1373, %v1546
        %v1675 = vmax.f32 %v1375, %v1547
        %v1676 = vmax.f32 %v1377, %v1548
        %v1677 = vmax.f32 %v1381, %v1549
        %v1678 = vmax.f32 %v1383, %v1550
        %v1679 = vmax.f32 %v1385, %v1551
        %v1680 = vmax.f32 %v1387, %v1552
        %v1681 = vmax.f32 %v1391, %v1553
        %v1682 = vmax.f32 %v1393, %v1554
        %v1683 = vmax.f32 %v1395, %v1555
        %v1684 = vmax.f32 %v1397, %v1556
        %v1685 = vmax.f32 %v1401, %v1557
        %v1686 = vmax.f32 %v1403, %v1558
        %v1687 = vmax.f32 %v1405, %v1559
        %v1688 = vmax.f32 %v1407, %v1560
        %v1689 = vmax.f32 %v1411, %v1561
        %v1690 = vmax.f32 %v1413, %v1562
        %v1691 = vmax.f32 %v1415, %v1563
        %v1692 = vmax.f32 %v1417, %v1564
        %v1693 = vmax.f32 %v1421, %v1565
        %v1694 = vmax.f32 %v1423, %v1566
        %v1695 = vmax.f32 %v1425, %v1567
        %v1696 = vmax.f32 %v1427, %v1568
        %v1697 = vmax.f32 %v1431, %v1569
        %v1698 = vmax.f32 %v1433, %v1570
        %v1699 = vmax.f32 %v1435, %v1571
        %v1700 = vmax.f32 %v1437, %v1572
        %v1701 = vmax.f32 %v1441, %v1573
        %v1702 = vmax.f32 %v1443, %v1574
        %v1703 = vmax.f32 %v1445, %v1575
        %v1704 = vmax.f32 %v1447, %v1576
        %v1705 = vpack.c.bf16 %v1579, %v1577
        %v1706 = vpack.c.bf16 %v1580, %v1578
        %v1707 = vpack.c.bf16 %v1583, %v1581
        %v1708 = vpack.c.bf16 %v1584, %v1582
        %v1709 = vpack.c.bf16 %v1587, %v1585
        %v1710 = vpack.c.bf16 %v1588, %v1586
        %v1711 = vpack.c.bf16 %v1591, %v1589
        %v1712 = vpack.c.bf16 %v1592, %v1590
        %v1713 = vpack.c.bf16 %v1595, %v1593
        %v1714 = vpack.c.bf16 %v1596, %v1594
        %v1715 = vpack.c.bf16 %v1599, %v1597
        %v1716 = vpack.c.bf16 %v1600, %v1598
        %v1717 = vpack.c.bf16 %v1603, %v1601
        %v1718 = vpack.c.bf16 %v1604, %v1602
        %v1719 = vpack.c.bf16 %v1607, %v1605
        %v1720 = vpack.c.bf16 %v1608, %v1606
        %v1721 = vpack.c.bf16 %v1611, %v1609
        %v1722 = vpack.c.bf16 %v1612, %v1610
        %v1723 = vpack.c.bf16 %v1615, %v1613
        %v1724 = vpack.c.bf16 %v1616, %v1614
        %v1725 = vpack.c.bf16 %v1619, %v1617
        %v1726 = vpack.c.bf16 %v1620, %v1618
        %v1727 = vpack.c.bf16 %v1623, %v1621
        %v1728 = vpack.c.bf16 %v1624, %v1622
        %v1729 = vpack.c.bf16 %v1627, %v1625
        %v1730 = vpack.c.bf16 %v1628, %v1626
        %v1731 = vpack.c.bf16 %v1631, %v1629
        %v1732 = vpack.c.bf16 %v1632, %v1630
        %v1733 = vpack.c.bf16 %v1635, %v1633
        %v1734 = vpack.c.bf16 %v1636, %v1634
        %v1735 = vpack.c.bf16 %v1639, %v1637
        %v1736 = vpack.c.bf16 %v1640, %v1638
        %v1737 = vpack.c.bf16 %v1643, %v1641
        %v1738 = vpack.c.bf16 %v1644, %v1642
        %v1739 = vpack.c.bf16 %v1647, %v1645
        %v1740 = vpack.c.bf16 %v1648, %v1646
        %v1741 = vpack.c.bf16 %v1651, %v1649
        %v1742 = vpack.c.bf16 %v1652, %v1650
        %v1743 = vpack.c.bf16 %v1655, %v1653
        %v1744 = vpack.c.bf16 %v1656, %v1654
        %v1745 = vpack.c.bf16 %v1659, %v1657
        %v1746 = vpack.c.bf16 %v1660, %v1658
        %v1747 = vpack.c.bf16 %v1663, %v1661
        %v1748 = vpack.c.bf16 %v1664, %v1662
        %v1749 = vpack.c.bf16 %v1667, %v1665
        %v1750 = vpack.c.bf16 %v1668, %v1666
        %v1751 = vpack.c.bf16 %v1671, %v1669
        %v1752 = vpack.c.bf16 %v1672, %v1670
        %v1753 = vpack.c.bf16 %v1675, %v1673
        %v1754 = vpack.c.bf16 %v1676, %v1674
        %v1755 = vpack.c.bf16 %v1679, %v1677
        %v1756 = vpack.c.bf16 %v1680, %v1678
        %v1757 = vpack.c.bf16 %v1683, %v1681
        %v1758 = vpack.c.bf16 %v1684, %v1682
        %v1759 = vpack.c.bf16 %v1687, %v1685
        %v1760 = vpack.c.bf16 %v1688, %v1686
        %v1761 = vpack.c.bf16 %v1691, %v1689
        %v1762 = vpack.c.bf16 %v1692, %v1690
        %v1763 = vpack.c.bf16 %v1695, %v1693
        %v1764 = vpack.c.bf16 %v1696, %v1694
        %v1765 = vpack.c.bf16 %v1699, %v1697
        %v1766 = vpack.c.bf16 %v1700, %v1698
        %v1767 = vpack.c.bf16 %v1703, %v1701
        %v1768 = vpack.c.bf16 %v1704, %v1702
        %v1769 = vld [vmem:[%s3] sm:$0xff]
        %v1770 = vld [vmem:[%s3 + $0x8] sm:$0xff]
        %v1771 = vld [vmem:[%s3 + $0x10] sm:$0xff]
        %v1772 = vld [vmem:[%s3 + $0x18] sm:$0xff]
        %v1773 = vld [vmem:[%s3 + $0x20] sm:$0xff]
        %v1774 = vld [vmem:[%s3 + $0x28] sm:$0xff]
        %v1775 = vld [vmem:[%s3 + $0x30] sm:$0xff]
        %v1776 = vld [vmem:[%s3 + $0x38] sm:$0xff]
        %v1777 = vld [vmem:[%s3 + $0x40] sm:$0xff]
        %v1778 = vld [vmem:[%s3 + $0x48] sm:$0xff]
        %v1779 = vld [vmem:[%s3 + $0x50] sm:$0xff]
        %v1780 = vld [vmem:[%s3 + $0x58] sm:$0xff]
        %v1781 = vld [vmem:[%s3 + $0x60] sm:$0xff]
        %v1782 = vld [vmem:[%s3 + $0x68] sm:$0xff]
        %v1783 = vld [vmem:[%s3 + $0x70] sm:$0xff]
        %v1784 = vld [vmem:[%s3 + $0x78] sm:$0xff]
        %v1785 = vld [vmem:[%s3 + $0x80] sm:$0xff]
        %v1786 = vld [vmem:[%s3 + $0x88] sm:$0xff]
        %v1787 = vld [vmem:[%s3 + $0x90] sm:$0xff]
        %v1788 = vld [vmem:[%s3 + $0x98] sm:$0xff]
        %v1789 = vld [vmem:[%s3 + $0xa0] sm:$0xff]
        %v1790 = vld [vmem:[%s3 + $0xa8] sm:$0xff]
        %v1791 = vld [vmem:[%s3 + $0xb0] sm:$0xff]
        %v1792 = vld [vmem:[%s3 + $0xb8] sm:$0xff]
        %v1793 = vld [vmem:[%s3 + $0xc0] sm:$0xff]
        %v1794 = vld [vmem:[%s3 + $0xc8] sm:$0xff]
        %v1795 = vld [vmem:[%s3 + $0xd0] sm:$0xff]
        %v1796 = vld [vmem:[%s3 + $0xd8] sm:$0xff]
        %v1797 = vld [vmem:[%s3 + $0xe0] sm:$0xff]
        %v1798 = vld [vmem:[%s3 + $0xe8] sm:$0xff]
        %v1799 = vld [vmem:[%s3 + $0xf0] sm:$0xff]
        %v1800 = vld [vmem:[%s3 + $0xf8] sm:$0xff]
        %v1801 = vld [vmem:[%s3 + $0x100] sm:$0xff]
        %v1802 = vld [vmem:[%s3 + $0x108] sm:$0xff]
        %v1803 = vld [vmem:[%s3 + $0x110] sm:$0xff]
        %v1804 = vld [vmem:[%s3 + $0x118] sm:$0xff]
        %v1805 = vld [vmem:[%s3 + $0x120] sm:$0xff]
        %v1806 = vld [vmem:[%s3 + $0x128] sm:$0xff]
        %v1807 = vld [vmem:[%s3 + $0x130] sm:$0xff]
        %v1808 = vld [vmem:[%s3 + $0x138] sm:$0xff]
        %v1809 = vld [vmem:[%s3 + $0x140] sm:$0xff]
        %v1810 = vld [vmem:[%s3 + $0x148] sm:$0xff]
        %v1811 = vld [vmem:[%s3 + $0x150] sm:$0xff]
        %v1812 = vld [vmem:[%s3 + $0x158] sm:$0xff]
        %v1813 = vld [vmem:[%s3 + $0x160] sm:$0xff]
        %v1814 = vld [vmem:[%s3 + $0x168] sm:$0xff]
        %v1815 = vld [vmem:[%s3 + $0x170] sm:$0xff]
        %v1816 = vld [vmem:[%s3 + $0x178] sm:$0xff]
        %v1817 = vld [vmem:[%s3 + $0x180] sm:$0xff]
        %v1818 = vld [vmem:[%s3 + $0x188] sm:$0xff]
        %v1819 = vld [vmem:[%s3 + $0x190] sm:$0xff]
        %v1820 = vld [vmem:[%s3 + $0x198] sm:$0xff]
        %v1821 = vld [vmem:[%s3 + $0x1a0] sm:$0xff]
        %v1822 = vld [vmem:[%s3 + $0x1a8] sm:$0xff]
        %v1823 = vld [vmem:[%s3 + $0x1b0] sm:$0xff]
        %v1824 = vld [vmem:[%s3 + $0x1b8] sm:$0xff]
        %v1825 = vld [vmem:[%s3 + $0x1c0] sm:$0xff]
        %v1826 = vld [vmem:[%s3 + $0x1c8] sm:$0xff]
        %v1827 = vld [vmem:[%s3 + $0x1d0] sm:$0xff]
        %v1828 = vld [vmem:[%s3 + $0x1d8] sm:$0xff]
        %v1829 = vld [vmem:[%s3 + $0x1e0] sm:$0xff]
        %v1830 = vld [vmem:[%s3 + $0x1e8] sm:$0xff]
        %v1831 = vld [vmem:[%s3 + $0x1f0] sm:$0xff]
        %v1832 = vld [vmem:[%s3 + $0x1f8] sm:$0xff]
        %v1833 = vld [vmem:[%s4] sm:$0xff]
        %v1834 = vld [vmem:[%s4 + $0x8] sm:$0xff]
        %v1835 = vld [vmem:[%s4 + $0x10] sm:$0xff]
        %v1836 = vld [vmem:[%s4 + $0x18] sm:$0xff]
        %v1837 = vld [vmem:[%s4 + $0x20] sm:$0xff]
        %v1838 = vld [vmem:[%s4 + $0x28] sm:$0xff]
        %v1839 = vld [vmem:[%s4 + $0x30] sm:$0xff]
        %v1840 = vld [vmem:[%s4 + $0x38] sm:$0xff]
        %v1841 = vld [vmem:[%s4 + $0x40] sm:$0xff]
        %v1842 = vld [vmem:[%s4 + $0x48] sm:$0xff]
        %v1843 = vld [vmem:[%s4 + $0x50] sm:$0xff]
        %v1844 = vld [vmem:[%s4 + $0x58] sm:$0xff]
        %v1845 = vld [vmem:[%s4 + $0x60] sm:$0xff]
        %v1846 = vld [vmem:[%s4 + $0x68] sm:$0xff]
        %v1847 = vld [vmem:[%s4 + $0x70] sm:$0xff]
        %v1848 = vld [vmem:[%s4 + $0x78] sm:$0xff]
        %v1849 = vld [vmem:[%s4 + $0x80] sm:$0xff]
        %v1850 = vld [vmem:[%s4 + $0x88] sm:$0xff]
        %v1851 = vld [vmem:[%s4 + $0x90] sm:$0xff]
        %v1852 = vld [vmem:[%s4 + $0x98] sm:$0xff]
        %v1853 = vld [vmem:[%s4 + $0xa0] sm:$0xff]
        %v1854 = vld [vmem:[%s4 + $0xa8] sm:$0xff]
        %v1855 = vld [vmem:[%s4 + $0xb0] sm:$0xff]
        %v1856 = vld [vmem:[%s4 + $0xb8] sm:$0xff]
        %v1857 = vld [vmem:[%s4 + $0xc0] sm:$0xff]
        %v1858 = vld [vmem:[%s4 + $0xc8] sm:$0xff]
        %v1859 = vld [vmem:[%s4 + $0xd0] sm:$0xff]
        %v1860 = vld [vmem:[%s4 + $0xd8] sm:$0xff]
        %v1861 = vld [vmem:[%s4 + $0xe0] sm:$0xff]
        %v1862 = vld [vmem:[%s4 + $0xe8] sm:$0xff]
        %v1863 = vld [vmem:[%s4 + $0xf0] sm:$0xff]
        %v1864 = vld [vmem:[%s4 + $0xf8] sm:$0xff]
        %1866 = vset.pattern.permute.xlu0 0
        %1867 = vperm.xlu0 %1866, %v1833
        %v1868 = vpop.permute.xlu0 %1867
        %1871 = vset.pattern.permute.xlu0 0
        %1872 = vperm.xlu0 %1871, %v1834
        %v1873 = vpop.permute.xlu0 %1872
        %1876 = vset.pattern.permute.xlu0 0
        %1877 = vperm.xlu0 %1876, %v1835
        %v1878 = vpop.permute.xlu0 %1877
        %1881 = vset.pattern.permute.xlu0 0
        %1882 = vperm.xlu0 %1881, %v1836
        %v1883 = vpop.permute.xlu0 %1882
        %1886 = vset.pattern.permute.xlu0 0
        %1887 = vperm.xlu0 %1886, %v1837
        %v1888 = vpop.permute.xlu0 %1887
        %1891 = vset.pattern.permute.xlu0 0
        %1892 = vperm.xlu0 %1891, %v1838
        %v1893 = vpop.permute.xlu0 %1892
        %1896 = vset.pattern.permute.xlu0 0
        %1897 = vperm.xlu0 %1896, %v1839
        %v1898 = vpop.permute.xlu0 %1897
        %1901 = vset.pattern.permute.xlu0 0
        %1902 = vperm.xlu0 %1901, %v1840
        %v1903 = vpop.permute.xlu0 %1902
        %1906 = vset.pattern.permute.xlu0 0
        %1907 = vperm.xlu0 %1906, %v1841
        %v1908 = vpop.permute.xlu0 %1907
        %1911 = vset.pattern.permute.xlu0 0
        %1912 = vperm.xlu0 %1911, %v1842
        %v1913 = vpop.permute.xlu0 %1912
        %1916 = vset.pattern.permute.xlu0 0
        %1917 = vperm.xlu0 %1916, %v1843
        %v1918 = vpop.permute.xlu0 %1917
        %1921 = vset.pattern.permute.xlu0 0
        %1922 = vperm.xlu0 %1921, %v1844
        %v1923 = vpop.permute.xlu0 %1922
        %1926 = vset.pattern.permute.xlu0 0
        %1927 = vperm.xlu0 %1926, %v1845
        %v1928 = vpop.permute.xlu0 %1927
        %1931 = vset.pattern.permute.xlu0 0
        %1932 = vperm.xlu0 %1931, %v1846
        %v1933 = vpop.permute.xlu0 %1932
        %1936 = vset.pattern.permute.xlu0 0
        %1937 = vperm.xlu0 %1936, %v1847
        %v1938 = vpop.permute.xlu0 %1937
        %1941 = vset.pattern.permute.xlu0 0
        %1942 = vperm.xlu0 %1941, %v1848
        %v1943 = vpop.permute.xlu0 %1942
        %1946 = vset.pattern.permute.xlu0 0
        %1947 = vperm.xlu0 %1946, %v1849
        %v1948 = vpop.permute.xlu0 %1947
        %1951 = vset.pattern.permute.xlu0 0
        %1952 = vperm.xlu0 %1951, %v1850
        %v1953 = vpop.permute.xlu0 %1952
        %1956 = vset.pattern.permute.xlu0 0
        %1957 = vperm.xlu0 %1956, %v1851
        %v1958 = vpop.permute.xlu0 %1957
        %1961 = vset.pattern.permute.xlu0 0
        %1962 = vperm.xlu0 %1961, %v1852
        %v1963 = vpop.permute.xlu0 %1962
        %1966 = vset.pattern.permute.xlu0 0
        %1967 = vperm.xlu0 %1966, %v1853
        %v1968 = vpop.permute.xlu0 %1967
        %1971 = vset.pattern.permute.xlu0 0
        %1972 = vperm.xlu0 %1971, %v1854
        %v1973 = vpop.permute.xlu0 %1972
        %1976 = vset.pattern.permute.xlu0 0
        %1977 = vperm.xlu0 %1976, %v1855
        %v1978 = vpop.permute.xlu0 %1977
        %1981 = vset.pattern.permute.xlu0 0
        %1982 = vperm.xlu0 %1981, %v1856
        %v1983 = vpop.permute.xlu0 %1982
        %1986 = vset.pattern.permute.xlu0 0
        %1987 = vperm.xlu0 %1986, %v1857
        %v1988 = vpop.permute.xlu0 %1987
        %1991 = vset.pattern.permute.xlu0 0
        %1992 = vperm.xlu0 %1991, %v1858
        %v1993 = vpop.permute.xlu0 %1992
        %1996 = vset.pattern.permute.xlu0 0
        %1997 = vperm.xlu0 %1996, %v1859
        %v1998 = vpop.permute.xlu0 %1997
        %2001 = vset.pattern.permute.xlu0 0
        %2002 = vperm.xlu0 %2001, %v1860
        %v2003 = vpop.permute.xlu0 %2002
        %2006 = vset.pattern.permute.xlu0 0
        %2007 = vperm.xlu0 %2006, %v1861
        %v2008 = vpop.permute.xlu0 %2007
        %2011 = vset.pattern.permute.xlu0 0
        %2012 = vperm.xlu0 %2011, %v1862
        %v2013 = vpop.permute.xlu0 %2012
        %2016 = vset.pattern.permute.xlu0 0
        %2017 = vperm.xlu0 %2016, %v1863
        %v2018 = vpop.permute.xlu0 %2017
        %2021 = vset.pattern.permute.xlu0 0
        %2022 = vperm.xlu0 %2021, %v1864
        %v2023 = vpop.permute.xlu0 %2022
        %v2089 = vunpack.c.l.b16 %v1769
        %v2090 = vunpack.c.h.b16 %v1769
        %v2091 = vunpack.c.l.b16 %v1770
        %v2092 = vunpack.c.h.b16 %v1770
        %v2093 = vunpack.c.l.b16 %v1771
        %v2094 = vunpack.c.h.b16 %v1771
        %v2095 = vunpack.c.l.b16 %v1772
        %v2096 = vunpack.c.h.b16 %v1772
        %v2097 = vunpack.c.l.b16 %v1773
        %v2098 = vunpack.c.h.b16 %v1773
        %v2099 = vunpack.c.l.b16 %v1774
        %v2100 = vunpack.c.h.b16 %v1774
        %v2101 = vunpack.c.l.b16 %v1775
        %v2102 = vunpack.c.h.b16 %v1775
        %v2103 = vunpack.c.l.b16 %v1776
        %v2104 = vunpack.c.h.b16 %v1776
        %v2105 = vunpack.c.l.b16 %v1777
        %v2106 = vunpack.c.h.b16 %v1777
        %v2107 = vunpack.c.l.b16 %v1778
        %v2108 = vunpack.c.h.b16 %v1778
        %v2109 = vunpack.c.l.b16 %v1779
        %v2110 = vunpack.c.h.b16 %v1779
        %v2111 = vunpack.c.l.b16 %v1780
        %v2112 = vunpack.c.h.b16 %v1780
        %v2113 = vunpack.c.l.b16 %v1781
        %v2114 = vunpack.c.h.b16 %v1781
        %v2115 = vunpack.c.l.b16 %v1782
        %v2116 = vunpack.c.h.b16 %v1782
        %v2117 = vunpack.c.l.b16 %v1783
        %v2118 = vunpack.c.h.b16 %v1783
        %v2119 = vunpack.c.l.b16 %v1784
        %v2120 = vunpack.c.h.b16 %v1784
        %v2121 = vunpack.c.l.b16 %v1785
        %v2122 = vunpack.c.h.b16 %v1785
        %v2123 = vunpack.c.l.b16 %v1786
        %v2124 = vunpack.c.h.b16 %v1786
        %v2125 = vunpack.c.l.b16 %v1787
        %v2126 = vunpack.c.h.b16 %v1787
        %v2127 = vunpack.c.l.b16 %v1788
        %v2128 = vunpack.c.h.b16 %v1788
        %v2129 = vunpack.c.l.b16 %v1789
        %v2130 = vunpack.c.h.b16 %v1789
        %v2131 = vunpack.c.l.b16 %v1790
        %v2132 = vunpack.c.h.b16 %v1790
        %v2133 = vunpack.c.l.b16 %v1791
        %v2134 = vunpack.c.h.b16 %v1791
        %v2135 = vunpack.c.l.b16 %v1792
        %v2136 = vunpack.c.h.b16 %v1792
        %v2137 = vunpack.c.l.b16 %v1793
        %v2138 = vunpack.c.h.b16 %v1793
        %v2139 = vunpack.c.l.b16 %v1794
        %v2140 = vunpack.c.h.b16 %v1794
        %v2141 = vunpack.c.l.b16 %v1795
        %v2142 = vunpack.c.h.b16 %v1795
        %v2143 = vunpack.c.l.b16 %v1796
        %v2144 = vunpack.c.h.b16 %v1796
        %v2145 = vunpack.c.l.b16 %v1797
        %v2146 = vunpack.c.h.b16 %v1797
        %v2147 = vunpack.c.l.b16 %v1798
        %v2148 = vunpack.c.h.b16 %v1798
        %v2149 = vunpack.c.l.b16 %v1799
        %v2150 = vunpack.c.h.b16 %v1799
        %v2151 = vunpack.c.l.b16 %v1800
        %v2152 = vunpack.c.h.b16 %v1800
        %v2153 = vunpack.c.l.b16 %v1801
        %v2154 = vunpack.c.h.b16 %v1801
        %v2155 = vunpack.c.l.b16 %v1802
        %v2156 = vunpack.c.h.b16 %v1802
        %v2157 = vunpack.c.l.b16 %v1803
        %v2158 = vunpack.c.h.b16 %v1803
        %v2159 = vunpack.c.l.b16 %v1804
        %v2160 = vunpack.c.h.b16 %v1804
        %v2161 = vunpack.c.l.b16 %v1805
        %v2162 = vunpack.c.h.b16 %v1805
        %v2163 = vunpack.c.l.b16 %v1806
        %v2164 = vunpack.c.h.b16 %v1806
        %v2165 = vunpack.c.l.b16 %v1807
        %v2166 = vunpack.c.h.b16 %v1807
        %v2167 = vunpack.c.l.b16 %v1808
        %v2168 = vunpack.c.h.b16 %v1808
        %v2169 = vunpack.c.l.b16 %v1809
        %v2170 = vunpack.c.h.b16 %v1809
        %v2171 = vunpack.c.l.b16 %v1810
        %v2172 = vunpack.c.h.b16 %v1810
        %v2173 = vunpack.c.l.b16 %v1811
        %v2174 = vunpack.c.h.b16 %v1811
        %v2175 = vunpack.c.l.b16 %v1812
        %v2176 = vunpack.c.h.b16 %v1812
        %v2177 = vunpack.c.l.b16 %v1813
        %v2178 = vunpack.c.h.b16 %v1813
        %v2179 = vunpack.c.l.b16 %v1814
        %v2180 = vunpack.c.h.b16 %v1814
        %v2181 = vunpack.c.l.b16 %v1815
        %v2182 = vunpack.c.h.b16 %v1815
        %v2183 = vunpack.c.l.b16 %v1816
        %v2184 = vunpack.c.h.b16 %v1816
        %v2185 = vunpack.c.l.b16 %v1817
        %v2186 = vunpack.c.h.b16 %v1817
        %v2187 = vunpack.c.l.b16 %v1818
        %v2188 = vunpack.c.h.b16 %v1818
        %v2189 = vunpack.c.l.b16 %v1819
        %v2190 = vunpack.c.h.b16 %v1819
        %v2191 = vunpack.c.l.b16 %v1820
        %v2192 = vunpack.c.h.b16 %v1820
        %v2193 = vunpack.c.l.b16 %v1821
        %v2194 = vunpack.c.h.b16 %v1821
        %v2195 = vunpack.c.l.b16 %v1822
        %v2196 = vunpack.c.h.b16 %v1822
        %v2197 = vunpack.c.l.b16 %v1823
        %v2198 = vunpack.c.h.b16 %v1823
        %v2199 = vunpack.c.l.b16 %v1824
        %v2200 = vunpack.c.h.b16 %v1824
        %v2201 = vunpack.c.l.b16 %v1825
        %v2202 = vunpack.c.h.b16 %v1825
        %v2203 = vunpack.c.l.b16 %v1826
        %v2204 = vunpack.c.h.b16 %v1826
        %v2205 = vunpack.c.l.b16 %v1827
        %v2206 = vunpack.c.h.b16 %v1827
        %v2207 = vunpack.c.l.b16 %v1828
        %v2208 = vunpack.c.h.b16 %v1828
        %v2209 = vunpack.c.l.b16 %v1829
        %v2210 = vunpack.c.h.b16 %v1829
        %v2211 = vunpack.c.l.b16 %v1830
        %v2212 = vunpack.c.h.b16 %v1830
        %v2213 = vunpack.c.l.b16 %v1831
        %v2214 = vunpack.c.h.b16 %v1831
        %v2215 = vunpack.c.l.b16 %v1832
        %v2216 = vunpack.c.h.b16 %v1832
        %v2217 = vpack.c.b16 %v2093, %v2089
        %v2218 = vpack.c.b16 %v2094, %v2090
        %v2219 = vpack.c.b16 %v2095, %v2091
        %v2220 = vpack.c.b16 %v2096, %v2092
        %v2221 = vpack.c.b16 %v2101, %v2097
        %v2222 = vpack.c.b16 %v2102, %v2098
        %v2223 = vpack.c.b16 %v2103, %v2099
        %v2224 = vpack.c.b16 %v2104, %v2100
        %v2225 = vpack.c.b16 %v2109, %v2105
        %v2226 = vpack.c.b16 %v2110, %v2106
        %v2227 = vpack.c.b16 %v2111, %v2107
        %v2228 = vpack.c.b16 %v2112, %v2108
        %v2229 = vpack.c.b16 %v2117, %v2113
        %v2230 = vpack.c.b16 %v2118, %v2114
        %v2231 = vpack.c.b16 %v2119, %v2115
        %v2232 = vpack.c.b16 %v2120, %v2116
        %v2233 = vpack.c.b16 %v2125, %v2121
        %v2234 = vpack.c.b16 %v2126, %v2122
        %v2235 = vpack.c.b16 %v2127, %v2123
        %v2236 = vpack.c.b16 %v2128, %v2124
        %v2237 = vpack.c.b16 %v2133, %v2129
        %v2238 = vpack.c.b16 %v2134, %v2130
        %v2239 = vpack.c.b16 %v2135, %v2131
        %v2240 = vpack.c.b16 %v2136, %v2132
        %v2241 = vpack.c.b16 %v2141, %v2137
        %v2242 = vpack.c.b16 %v2142, %v2138
        %v2243 = vpack.c.b16 %v2143, %v2139
        %v2244 = vpack.c.b16 %v2144, %v2140
        %v2245 = vpack.c.b16 %v2149, %v2145
        %v2246 = vpack.c.b16 %v2150, %v2146
        %v2247 = vpack.c.b16 %v2151, %v2147
        %v2248 = vpack.c.b16 %v2152, %v2148
        %v2249 = vpack.c.b16 %v2157, %v2153
        %v2250 = vpack.c.b16 %v2158, %v2154
        %v2251 = vpack.c.b16 %v2159, %v2155
        %v2252 = vpack.c.b16 %v2160, %v2156
        %v2253 = vpack.c.b16 %v2165, %v2161
        %v2254 = vpack.c.b16 %v2166, %v2162
        %v2255 = vpack.c.b16 %v2167, %v2163
        %v2256 = vpack.c.b16 %v2168, %v2164
        %v2257 = vpack.c.b16 %v2173, %v2169
        %v2258 = vpack.c.b16 %v2174, %v2170
        %v2259 = vpack.c.b16 %v2175, %v2171
        %v2260 = vpack.c.b16 %v2176, %v2172
        %v2261 = vpack.c.b16 %v2181, %v2177
        %v2262 = vpack.c.b16 %v2182, %v2178
        %v2263 = vpack.c.b16 %v2183, %v2179
        %v2264 = vpack.c.b16 %v2184, %v2180
        %v2265 = vpack.c.b16 %v2189, %v2185
        %v2266 = vpack.c.b16 %v2190, %v2186
        %v2267 = vpack.c.b16 %v2191, %v2187
        %v2268 = vpack.c.b16 %v2192, %v2188
        %v2269 = vpack.c.b16 %v2197, %v2193
        %v2270 = vpack.c.b16 %v2198, %v2194
        %v2271 = vpack.c.b16 %v2199, %v2195
        %v2272 = vpack.c.b16 %v2200, %v2196
        %v2273 = vpack.c.b16 %v2205, %v2201
        %v2274 = vpack.c.b16 %v2206, %v2202
        %v2275 = vpack.c.b16 %v2207, %v2203
        %v2276 = vpack.c.b16 %v2208, %v2204
        %v2277 = vpack.c.b16 %v2213, %v2209
        %v2278 = vpack.c.b16 %v2214, %v2210
        %v2279 = vpack.c.b16 %v2215, %v2211
        %v2280 = vpack.c.b16 %v2216, %v2212
        %2345 = vmatprep.subr.bf16.mxu0 %v1706
        %2346 = vmatpush1.bf16.msra.mxu0 %v1705
        %2347 = vmatprep.subr.bf16.mxu0 %v1708
        %2348 = vmatpush1.bf16.msra.mxu0 %v1707
        %2349 = vmatprep.subr.bf16.mxu0 %v1710
        %2350 = vmatpush1.bf16.msra.mxu0 %v1709
        %2351 = vmatprep.subr.bf16.mxu0 %v1712
        %2352 = vmatpush1.bf16.msra.mxu0 %v1711
        %2353 = vmatprep.subr.bf16.mxu0 %v1714
        %2354 = vmatpush1.bf16.msra.mxu0 %v1713
        %2355 = vmatprep.subr.bf16.mxu0 %v1716
        %2356 = vmatpush1.bf16.msra.mxu0 %v1715
        %2357 = vmatprep.subr.bf16.mxu0 %v1718
        %2358 = vmatpush1.bf16.msra.mxu0 %v1717
        %2359 = vmatprep.subr.bf16.mxu0 %v1720
        %2360 = vmatpush1.bf16.msra.mxu0 %v1719
        %2361 = vmatprep.subr.bf16.mxu0 %v1722
        %2362 = vmatpush1.bf16.msra.mxu0 %v1721
        %2363 = vmatprep.subr.bf16.mxu0 %v1724
        %2364 = vmatpush1.bf16.msra.mxu0 %v1723
        %2365 = vmatprep.subr.bf16.mxu0 %v1726
        %2366 = vmatpush1.bf16.msra.mxu0 %v1725
        %2367 = vmatprep.subr.bf16.mxu0 %v1728
        %2368 = vmatpush1.bf16.msra.mxu0 %v1727
        %2369 = vmatprep.subr.bf16.mxu0 %v1730
        %2370 = vmatpush1.bf16.msra.mxu0 %v1729
        %2371 = vmatprep.subr.bf16.mxu0 %v1732
        %2372 = vmatpush1.bf16.msra.mxu0 %v1731
        %2373 = vmatprep.subr.bf16.mxu0 %v1734
        %2374 = vmatpush1.bf16.msra.mxu0 %v1733
        %2375 = vmatprep.subr.bf16.mxu0 %v1736
        %2376 = vmatpush1.bf16.msra.mxu0 %v1735
        %2377 = vmatprep.mubr.bf16.mxu0 %v2218
        %2378 = vmatmul.mubr.bf16.gmra.mrb[0].mxu0 %v2217
        %v2379 = vpop.f32.mrb[0].mxu0
        %v2380 = vadd.f32 %v1868, %v2379
        %v2381 = vpop.f32.mrb[0].mxu0
        %v2382 = vadd.f32 %v1868, %v2381
        %v2383 = vpop.f32.mrb[0].mxu0
        %v2384 = vadd.f32 %v1873, %v2383
        %v2385 = vpop.f32.mrb[0].mxu0
        %v2386 = vadd.f32 %v1873, %v2385
        %2387 = vmatprep.mubr.bf16.mxu0 %v2222
        %2388 = vmatmul.mubr.bf16.gmra.mrb[0].mxu0 %v2221
        %v2389 = vpop.f32.mrb[0].mxu0
        %v2390 = vadd.f32 %v1878, %v2389
        %v2391 = vpop.f32.mrb[0].mxu0
        %v2392 = vadd.f32 %v1878, %v2391
        %v2393 = vpop.f32.mrb[0].mxu0
        %v2394 = vadd.f32 %v1883, %v2393
        %v2395 = vpop.f32.mrb[0].mxu0
        %v2396 = vadd.f32 %v1883, %v2395
        %2397 = vmatprep.mubr.bf16.mxu0 %v2226
        %2398 = vmatmul.mubr.bf16.gmra.mrb[0].mxu0 %v2225
        %v2399 = vpop.f32.mrb[0].mxu0
        %v2400 = vadd.f32 %v1888, %v2399
        %v2401 = vpop.f32.mrb[0].mxu0
        %v2402 = vadd.f32 %v1888, %v2401
        %v2403 = vpop.f32.mrb[0].mxu0
        %v2404 = vadd.f32 %v1893, %v2403
        %v2405 = vpop.f32.mrb[0].mxu0
        %v2406 = vadd.f32 %v1893, %v2405
        %2407 = vmatprep.mubr.bf16.mxu0 %v2230
        %2408 = vmatmul.mubr.bf16.gmra.mrb[0].mxu0 %v2229
        %v2409 = vpop.f32.mrb[0].mxu0
        %v2410 = vadd.f32 %v1898, %v2409
        %v2411 = vpop.f32.mrb[0].mxu0
        %v2412 = vadd.f32 %v1898, %v2411
        %v2413 = vpop.f32.mrb[0].mxu0
        %v2414 = vadd.f32 %v1903, %v2413
        %v2415 = vpop.f32.mrb[0].mxu0
        %v2416 = vadd.f32 %v1903, %v2415
        %2417 = vmatprep.mubr.bf16.mxu0 %v2234
        %2418 = vmatmul.mubr.bf16.gmra.mrb[0].mxu0 %v2233
        %v2419 = vpop.f32.mrb[0].mxu0
        %v2420 = vadd.f32 %v1908, %v2419
        %v2421 = vpop.f32.mrb[0].mxu0
        %v2422 = vadd.f32 %v1908, %v2421
        %v2423 = vpop.f32.mrb[0].mxu0
        %v2424 = vadd.f32 %v1913, %v2423
        %v2425 = vpop.f32.mrb[0].mxu0
        %v2426 = vadd.f32 %v1913, %v2425
        %2427 = vmatprep.mubr.bf16.mxu0 %v2238
        %2428 = vmatmul.mubr.bf16.gmra.mrb[0].mxu0 %v2237
        %v2429 = vpop.f32.mrb[0].mxu0
        %v2430 = vadd.f32 %v1918, %v2429
        %v2431 = vpop.f32.mrb[0].mxu0
        %v2432 = vadd.f32 %v1918, %v2431
        %v2433 = vpop.f32.mrb[0].mxu0
        %v2434 = vadd.f32 %v1923, %v2433
        %v2435 = vpop.f32.mrb[0].mxu0
        %v2436 = vadd.f32 %v1923, %v2435
        %2437 = vmatprep.mubr.bf16.mxu0 %v2242
        %2438 = vmatmul.mubr.bf16.gmra.mrb[0].mxu0 %v2241
        %v2439 = vpop.f32.mrb[0].mxu0
        %v2440 = vadd.f32 %v1928, %v2439
        %v2441 = vpop.f32.mrb[0].mxu0
        %v2442 = vadd.f32 %v1928, %v2441
        %v2443 = vpop.f32.mrb[0].mxu0
        %v2444 = vadd.f32 %v1933, %v2443
        %v2445 = vpop.f32.mrb[0].mxu0
        %v2446 = vadd.f32 %v1933, %v2445
        %2447 = vmatprep.mubr.bf16.mxu0 %v2246
        %2448 = vmatmul.mubr.bf16.gmra.mrb[0].mxu0 %v2245
        %v2449 = vpop.f32.mrb[0].mxu0
        %v2450 = vadd.f32 %v1938, %v2449
        %v2451 = vpop.f32.mrb[0].mxu0
        %v2452 = vadd.f32 %v1938, %v2451
        %v2453 = vpop.f32.mrb[0].mxu0
        %v2454 = vadd.f32 %v1943, %v2453
        %v2455 = vpop.f32.mrb[0].mxu0
        %v2456 = vadd.f32 %v1943, %v2455
        %2457 = vmatprep.mubr.bf16.mxu0 %v2250
        %2458 = vmatmul.mubr.bf16.gmra.mrb[0].mxu0 %v2249
        %v2459 = vpop.f32.mrb[0].mxu0
        %v2460 = vadd.f32 %v1948, %v2459
        %v2461 = vpop.f32.mrb[0].mxu0
        %v2462 = vadd.f32 %v1948, %v2461
        %v2463 = vpop.f32.mrb[0].mxu0
        %v2464 = vadd.f32 %v1953, %v2463
        %v2465 = vpop.f32.mrb[0].mxu0
        %v2466 = vadd.f32 %v1953, %v2465
        %2467 = vmatprep.mubr.bf16.mxu0 %v2254
        %2468 = vmatmul.mubr.bf16.gmra.mrb[0].mxu0 %v2253
        %v2469 = vpop.f32.mrb[0].mxu0
        %v2470 = vadd.f32 %v1958, %v2469
        %v2471 = vpop.f32.mrb[0].mxu0
        %v2472 = vadd.f32 %v1958, %v2471
        %v2473 = vpop.f32.mrb[0].mxu0
        %v2474 = vadd.f32 %v1963, %v2473
        %v2475 = vpop.f32.mrb[0].mxu0
        %v2476 = vadd.f32 %v1963, %v2475
        %2477 = vmatprep.mubr.bf16.mxu0 %v2258
        %2478 = vmatmul.mubr.bf16.gmra.mrb[0].mxu0 %v2257
        %v2479 = vpop.f32.mrb[0].mxu0
        %v2480 = vadd.f32 %v1968, %v2479
        %v2481 = vpop.f32.mrb[0].mxu0
        %v2482 = vadd.f32 %v1968, %v2481
        %v2483 = vpop.f32.mrb[0].mxu0
        %v2484 = vadd.f32 %v1973, %v2483
        %v2485 = vpop.f32.mrb[0].mxu0
        %v2486 = vadd.f32 %v1973, %v2485
        %2487 = vmatprep.mubr.bf16.mxu0 %v2262
        %2488 = vmatmul.mubr.bf16.gmra.mrb[0].mxu0 %v2261
        %v2489 = vpop.f32.mrb[0].mxu0
        %v2490 = vadd.f32 %v1978, %v2489
        %v2491 = vpop.f32.mrb[0].mxu0
        %v2492 = vadd.f32 %v1978, %v2491
        %v2493 = vpop.f32.mrb[0].mxu0
        %v2494 = vadd.f32 %v1983, %v2493
        %v2495 = vpop.f32.mrb[0].mxu0
        %v2496 = vadd.f32 %v1983, %v2495
        %2497 = vmatprep.mubr.bf16.mxu0 %v2266
        %2498 = vmatmul.mubr.bf16.gmra.mrb[0].mxu0 %v2265
        %v2499 = vpop.f32.mrb[0].mxu0
        %v2500 = vadd.f32 %v1988, %v2499
        %v2501 = vpop.f32.mrb[0].mxu0
        %v2502 = vadd.f32 %v1988, %v2501
        %v2503 = vpop.f32.mrb[0].mxu0
        %v2504 = vadd.f32 %v1993, %v2503
        %v2505 = vpop.f32.mrb[0].mxu0
        %v2506 = vadd.f32 %v1993, %v2505
        %2507 = vmatprep.mubr.bf16.mxu0 %v2270
        %2508 = vmatmul.mubr.bf16.gmra.mrb[0].mxu0 %v2269
        %v2509 = vpop.f32.mrb[0].mxu0
        %v2510 = vadd.f32 %v1998, %v2509
        %v2511 = vpop.f32.mrb[0].mxu0
        %v2512 = vadd.f32 %v1998, %v2511
        %v2513 = vpop.f32.mrb[0].mxu0
        %v2514 = vadd.f32 %v2003, %v2513
        %v2515 = vpop.f32.mrb[0].mxu0
        %v2516 = vadd.f32 %v2003, %v2515
        %2517 = vmatprep.mubr.bf16.mxu0 %v2274
        %2518 = vmatmul.mubr.bf16.gmra.mrb[0].mxu0 %v2273
        %v2519 = vpop.f32.mrb[0].mxu0
        %v2520 = vadd.f32 %v2008, %v2519
        %v2521 = vpop.f32.mrb[0].mxu0
        %v2522 = vadd.f32 %v2008, %v2521
        %v2523 = vpop.f32.mrb[0].mxu0
        %v2524 = vadd.f32 %v2013, %v2523
        %v2525 = vpop.f32.mrb[0].mxu0
        %v2526 = vadd.f32 %v2013, %v2525
        %2527 = vmatprep.mubr.bf16.mxu0 %v2278
        %2528 = vmatmul.mubr.bf16.gmra.mrb[0].mxu0 %v2277
        %v2529 = vpop.f32.mrb[0].mxu0
        %v2530 = vadd.f32 %v2018, %v2529
        %v2531 = vpop.f32.mrb[0].mxu0
        %v2532 = vadd.f32 %v2018, %v2531
        %v2533 = vpop.f32.mrb[0].mxu0
        %v2534 = vadd.f32 %v2023, %v2533
        %v2535 = vpop.f32.mrb[0].mxu0
        %v2536 = vadd.f32 %v2023, %v2535
        %2537 = vdwg.mxu0
        %2538 = vmatprep.subr.bf16.mxu0 %v1738
        %2539 = vmatpush1.bf16.msra.mxu0 %v1737
        %2540 = vmatprep.subr.bf16.mxu0 %v1740
        %2541 = vmatpush1.bf16.msra.mxu0 %v1739
        %2542 = vmatprep.subr.bf16.mxu0 %v1742
        %2543 = vmatpush1.bf16.msra.mxu0 %v1741
        %2544 = vmatprep.subr.bf16.mxu0 %v1744
        %2545 = vmatpush1.bf16.msra.mxu0 %v1743
        %2546 = vmatprep.subr.bf16.mxu0 %v1746
        %2547 = vmatpush1.bf16.msra.mxu0 %v1745
        %2548 = vmatprep.subr.bf16.mxu0 %v1748
        %2549 = vmatpush1.bf16.msra.mxu0 %v1747
        %2550 = vmatprep.subr.bf16.mxu0 %v1750
        %2551 = vmatpush1.bf16.msra.mxu0 %v1749
        %2552 = vmatprep.subr.bf16.mxu0 %v1752
        %2553 = vmatpush1.bf16.msra.mxu0 %v1751
        %2554 = vmatprep.subr.bf16.mxu0 %v1754
        %2555 = vmatpush1.bf16.msra.mxu0 %v1753
        %2556 = vmatprep.subr.bf16.mxu0 %v1756
        %2557 = vmatpush1.bf16.msra.mxu0 %v1755
        %2558 = vmatprep.subr.bf16.mxu0 %v1758
        %2559 = vmatpush1.bf16.msra.mxu0 %v1757
        %2560 = vmatprep.subr.bf16.mxu0 %v1760
        %2561 = vmatpush1.bf16.msra.mxu0 %v1759
        %2562 = vmatprep.subr.bf16.mxu0 %v1762
        %2563 = vmatpush1.bf16.msra.mxu0 %v1761
        %2564 = vmatprep.subr.bf16.mxu0 %v1764
        %2565 = vmatpush1.bf16.msra.mxu0 %v1763
        %2566 = vmatprep.subr.bf16.mxu0 %v1766
        %2567 = vmatpush1.bf16.msra.mxu0 %v1765
        %2568 = vmatprep.subr.bf16.mxu0 %v1768
        %2569 = vmatpush1.bf16.msra.mxu0 %v1767
        %2570 = vmatprep.mubr.bf16.mxu0 %v2220
        %2571 = vmatmul.mubr.bf16.gmra.mrb[0].mxu0 %v2219
        %v2572 = vpop.f32.mrb[0].mxu0
        %v2573 = vadd.f32 %v2380, %v2572
        %v2574 = vpop.f32.mrb[0].mxu0
        %v2575 = vadd.f32 %v2382, %v2574
        %v2576 = vpop.f32.mrb[0].mxu0
        %v2577 = vadd.f32 %v2384, %v2576
        %v2578 = vpop.f32.mrb[0].mxu0
        %v2579 = vadd.f32 %v2386, %v2578
        %2580 = vmatprep.mubr.bf16.mxu0 %v2224
        %2581 = vmatmul.mubr.bf16.gmra.mrb[0].mxu0 %v2223
        %v2582 = vpop.f32.mrb[0].mxu0
        %v2583 = vadd.f32 %v2390, %v2582
        %v2584 = vpop.f32.mrb[0].mxu0
        %v2585 = vadd.f32 %v2392, %v2584
        %v2586 = vpop.f32.mrb[0].mxu0
        %v2587 = vadd.f32 %v2394, %v2586
        %v2588 = vpop.f32.mrb[0].mxu0
        %v2589 = vadd.f32 %v2396, %v2588
        %2590 = vmatprep.mubr.bf16.mxu0 %v2228
        %2591 = vmatmul.mubr.bf16.gmra.mrb[0].mxu0 %v2227
        %v2592 = vpop.f32.mrb[0].mxu0
        %v2593 = vadd.f32 %v2400, %v2592
        %v2594 = vpop.f32.mrb[0].mxu0
        %v2595 = vadd.f32 %v2402, %v2594
        %v2596 = vpop.f32.mrb[0].mxu0
        %v2597 = vadd.f32 %v2404, %v2596
        %v2598 = vpop.f32.mrb[0].mxu0
        %v2599 = vadd.f32 %v2406, %v2598
        %2600 = vmatprep.mubr.bf16.mxu0 %v2232
        %2601 = vmatmul.mubr.bf16.gmra.mrb[0].mxu0 %v2231
        %v2602 = vpop.f32.mrb[0].mxu0
        %v2603 = vadd.f32 %v2410, %v2602
        %v2604 = vpop.f32.mrb[0].mxu0
        %v2605 = vadd.f32 %v2412, %v2604
        %v2606 = vpop.f32.mrb[0].mxu0
        %v2607 = vadd.f32 %v2414, %v2606
        %v2608 = vpop.f32.mrb[0].mxu0
        %v2609 = vadd.f32 %v2416, %v2608
        %2610 = vmatprep.mubr.bf16.mxu0 %v2236
        %2611 = vmatmul.mubr.bf16.gmra.mrb[0].mxu0 %v2235
        %v2612 = vpop.f32.mrb[0].mxu0
        %v2613 = vadd.f32 %v2420, %v2612
        %v2614 = vpop.f32.mrb[0].mxu0
        %v2615 = vadd.f32 %v2422, %v2614
        %v2616 = vpop.f32.mrb[0].mxu0
        %v2617 = vadd.f32 %v2424, %v2616
        %v2618 = vpop.f32.mrb[0].mxu0
        %v2619 = vadd.f32 %v2426, %v2618
        %2620 = vmatprep.mubr.bf16.mxu0 %v2240
        %2621 = vmatmul.mubr.bf16.gmra.mrb[0].mxu0 %v2239
        %v2622 = vpop.f32.mrb[0].mxu0
        %v2623 = vadd.f32 %v2430, %v2622
        %v2624 = vpop.f32.mrb[0].mxu0
        %v2625 = vadd.f32 %v2432, %v2624
        %v2626 = vpop.f32.mrb[0].mxu0
        %v2627 = vadd.f32 %v2434, %v2626
        %v2628 = vpop.f32.mrb[0].mxu0
        %v2629 = vadd.f32 %v2436, %v2628
        %2630 = vmatprep.mubr.bf16.mxu0 %v2244
        %2631 = vmatmul.mubr.bf16.gmra.mrb[0].mxu0 %v2243
        %v2632 = vpop.f32.mrb[0].mxu0
        %v2633 = vadd.f32 %v2440, %v2632
        %v2634 = vpop.f32.mrb[0].mxu0
        %v2635 = vadd.f32 %v2442, %v2634
        %v2636 = vpop.f32.mrb[0].mxu0
        %v2637 = vadd.f32 %v2444, %v2636
        %v2638 = vpop.f32.mrb[0].mxu0
        %v2639 = vadd.f32 %v2446, %v2638
        %2640 = vmatprep.mubr.bf16.mxu0 %v2248
        %2641 = vmatmul.mubr.bf16.gmra.mrb[0].mxu0 %v2247
        %v2642 = vpop.f32.mrb[0].mxu0
        %v2643 = vadd.f32 %v2450, %v2642
        %v2644 = vpop.f32.mrb[0].mxu0
        %v2645 = vadd.f32 %v2452, %v2644
        %v2646 = vpop.f32.mrb[0].mxu0
        %v2647 = vadd.f32 %v2454, %v2646
        %v2648 = vpop.f32.mrb[0].mxu0
        %v2649 = vadd.f32 %v2456, %v2648
        %2650 = vmatprep.mubr.bf16.mxu0 %v2252
        %2651 = vmatmul.mubr.bf16.gmra.mrb[0].mxu0 %v2251
        %v2652 = vpop.f32.mrb[0].mxu0
        %v2653 = vadd.f32 %v2460, %v2652
        %v2654 = vpop.f32.mrb[0].mxu0
        %v2655 = vadd.f32 %v2462, %v2654
        %v2656 = vpop.f32.mrb[0].mxu0
        %v2657 = vadd.f32 %v2464, %v2656
        %v2658 = vpop.f32.mrb[0].mxu0
        %v2659 = vadd.f32 %v2466, %v2658
        %2660 = vmatprep.mubr.bf16.mxu0 %v2256
        %2661 = vmatmul.mubr.bf16.gmra.mrb[0].mxu0 %v2255
        %v2662 = vpop.f32.mrb[0].mxu0
        %v2663 = vadd.f32 %v2470, %v2662
        %v2664 = vpop.f32.mrb[0].mxu0
        %v2665 = vadd.f32 %v2472, %v2664
        %v2666 = vpop.f32.mrb[0].mxu0
        %v2667 = vadd.f32 %v2474, %v2666
        %v2668 = vpop.f32.mrb[0].mxu0
        %v2669 = vadd.f32 %v2476, %v2668
        %2670 = vmatprep.mubr.bf16.mxu0 %v2260
        %2671 = vmatmul.mubr.bf16.gmra.mrb[0].mxu0 %v2259
        %v2672 = vpop.f32.mrb[0].mxu0
        %v2673 = vadd.f32 %v2480, %v2672
        %v2674 = vpop.f32.mrb[0].mxu0
        %v2675 = vadd.f32 %v2482, %v2674
        %v2676 = vpop.f32.mrb[0].mxu0
        %v2677 = vadd.f32 %v2484, %v2676
        %v2678 = vpop.f32.mrb[0].mxu0
        %v2679 = vadd.f32 %v2486, %v2678
        %2680 = vmatprep.mubr.bf16.mxu0 %v2264
        %2681 = vmatmul.mubr.bf16.gmra.mrb[0].mxu0 %v2263
        %v2682 = vpop.f32.mrb[0].mxu0
        %v2683 = vadd.f32 %v2490, %v2682
        %v2684 = vpop.f32.mrb[0].mxu0
        %v2685 = vadd.f32 %v2492, %v2684
        %v2686 = vpop.f32.mrb[0].mxu0
        %v2687 = vadd.f32 %v2494, %v2686
        %v2688 = vpop.f32.mrb[0].mxu0
        %v2689 = vadd.f32 %v2496, %v2688
        %2690 = vmatprep.mubr.bf16.mxu0 %v2268
        %2691 = vmatmul.mubr.bf16.gmra.mrb[0].mxu0 %v2267
        %v2692 = vpop.f32.mrb[0].mxu0
        %v2693 = vadd.f32 %v2500, %v2692
        %v2694 = vpop.f32.mrb[0].mxu0
        %v2695 = vadd.f32 %v2502, %v2694
        %v2696 = vpop.f32.mrb[0].mxu0
        %v2697 = vadd.f32 %v2504, %v2696
        %v2698 = vpop.f32.mrb[0].mxu0
        %v2699 = vadd.f32 %v2506, %v2698
        %2700 = vmatprep.mubr.bf16.mxu0 %v2272
        %2701 = vmatmul.mubr.bf16.gmra.mrb[0].mxu0 %v2271
        %v2702 = vpop.f32.mrb[0].mxu0
        %v2703 = vadd.f32 %v2510, %v2702
        %v2704 = vpop.f32.mrb[0].mxu0
        %v2705 = vadd.f32 %v2512, %v2704
        %v2706 = vpop.f32.mrb[0].mxu0
        %v2707 = vadd.f32 %v2514, %v2706
        %v2708 = vpop.f32.mrb[0].mxu0
        %v2709 = vadd.f32 %v2516, %v2708
        %2710 = vmatprep.mubr.bf16.mxu0 %v2276
        %2711 = vmatmul.mubr.bf16.gmra.mrb[0].mxu0 %v2275
        %v2712 = vpop.f32.mrb[0].mxu0
        %v2713 = vadd.f32 %v2520, %v2712
        %v2714 = vpop.f32.mrb[0].mxu0
        %v2715 = vadd.f32 %v2522, %v2714
        %v2716 = vpop.f32.mrb[0].mxu0
        %v2717 = vadd.f32 %v2524, %v2716
        %v2718 = vpop.f32.mrb[0].mxu0
        %v2719 = vadd.f32 %v2526, %v2718
        %2720 = vmatprep.mubr.bf16.mxu0 %v2280
        %2721 = vmatmul.mubr.bf16.gmra.mrb[0].mxu0 %v2279
        %v2722 = vpop.f32.mrb[0].mxu0
        %v2723 = vadd.f32 %v2530, %v2722
        %v2724 = vpop.f32.mrb[0].mxu0
        %v2725 = vadd.f32 %v2532, %v2724
        %v2726 = vpop.f32.mrb[0].mxu0
        %v2727 = vadd.f32 %v2534, %v2726
        %v2728 = vpop.f32.mrb[0].mxu0
        %v2729 = vadd.f32 %v2536, %v2728
        %2730 = vdwg.mxu0
        %v2731 = vmul.f32 %v2573, 0.2
        %v2732 = vmul.f32 %v2575, 0.2
        %v2733 = vmul.f32 %v2577, 0.2
        %v2734 = vmul.f32 %v2579, 0.2
        %v2735 = vmul.f32 %v2583, 0.2
        %v2736 = vmul.f32 %v2585, 0.2
        %v2737 = vmul.f32 %v2587, 0.2
        %v2738 = vmul.f32 %v2589, 0.2
        %v2739 = vmul.f32 %v2593, 0.2
        %v2740 = vmul.f32 %v2595, 0.2
        %v2741 = vmul.f32 %v2597, 0.2
        %v2742 = vmul.f32 %v2599, 0.2
        %v2743 = vmul.f32 %v2603, 0.2
        %v2744 = vmul.f32 %v2605, 0.2
        %v2745 = vmul.f32 %v2607, 0.2
        %v2746 = vmul.f32 %v2609, 0.2
        %v2747 = vmul.f32 %v2613, 0.2
        %v2748 = vmul.f32 %v2615, 0.2
        %v2749 = vmul.f32 %v2617, 0.2
        %v2750 = vmul.f32 %v2619, 0.2
        %v2751 = vmul.f32 %v2623, 0.2
        %v2752 = vmul.f32 %v2625, 0.2
        %v2753 = vmul.f32 %v2627, 0.2
        %v2754 = vmul.f32 %v2629, 0.2
        %v2755 = vmul.f32 %v2633, 0.2
        %v2756 = vmul.f32 %v2635, 0.2
        %v2757 = vmul.f32 %v2637, 0.2
        %v2758 = vmul.f32 %v2639, 0.2
        %v2759 = vmul.f32 %v2643, 0.2
        %v2760 = vmul.f32 %v2645, 0.2
        %v2761 = vmul.f32 %v2647, 0.2
        %v2762 = vmul.f32 %v2649, 0.2
        %v2763 = vmul.f32 %v2653, 0.2
        %v2764 = vmul.f32 %v2655, 0.2
        %v2765 = vmul.f32 %v2657, 0.2
        %v2766 = vmul.f32 %v2659, 0.2
        %v2767 = vmul.f32 %v2663, 0.2
        %v2768 = vmul.f32 %v2665, 0.2
        %v2769 = vmul.f32 %v2667, 0.2
        %v2770 = vmul.f32 %v2669, 0.2
        %v2771 = vmul.f32 %v2673, 0.2
        %v2772 = vmul.f32 %v2675, 0.2
        %v2773 = vmul.f32 %v2677, 0.2
        %v2774 = vmul.f32 %v2679, 0.2
        %v2775 = vmul.f32 %v2683, 0.2
        %v2776 = vmul.f32 %v2685, 0.2
        %v2777 = vmul.f32 %v2687, 0.2
        %v2778 = vmul.f32 %v2689, 0.2
        %v2779 = vmul.f32 %v2693, 0.2
        %v2780 = vmul.f32 %v2695, 0.2
        %v2781 = vmul.f32 %v2697, 0.2
        %v2782 = vmul.f32 %v2699, 0.2
        %v2783 = vmul.f32 %v2703, 0.2
        %v2784 = vmul.f32 %v2705, 0.2
        %v2785 = vmul.f32 %v2707, 0.2
        %v2786 = vmul.f32 %v2709, 0.2
        %v2787 = vmul.f32 %v2713, 0.2
        %v2788 = vmul.f32 %v2715, 0.2
        %v2789 = vmul.f32 %v2717, 0.2
        %v2790 = vmul.f32 %v2719, 0.2
        %v2791 = vmul.f32 %v2723, 0.2
        %v2792 = vmul.f32 %v2725, 0.2
        %v2793 = vmul.f32 %v2727, 0.2
        %v2794 = vmul.f32 %v2729, 0.2
        %v2795 = vmax.f32 %v2573, %v2731
        %v2796 = vmax.f32 %v2575, %v2732
        %v2797 = vmax.f32 %v2577, %v2733
        %v2798 = vmax.f32 %v2579, %v2734
        %v2799 = vmax.f32 %v2583, %v2735
        %v2800 = vmax.f32 %v2585, %v2736
        %v2801 = vmax.f32 %v2587, %v2737
        %v2802 = vmax.f32 %v2589, %v2738
        %v2803 = vmax.f32 %v2593, %v2739
        %v2804 = vmax.f32 %v2595, %v2740
        %v2805 = vmax.f32 %v2597, %v2741
        %v2806 = vmax.f32 %v2599, %v2742
        %v2807 = vmax.f32 %v2603, %v2743
        %v2808 = vmax.f32 %v2605, %v2744
        %v2809 = vmax.f32 %v2607, %v2745
        %v2810 = vmax.f32 %v2609, %v2746
        %v2811 = vmax.f32 %v2613, %v2747
        %v2812 = vmax.f32 %v2615, %v2748
        %v2813 = vmax.f32 %v2617, %v2749
        %v2814 = vmax.f32 %v2619, %v2750
        %v2815 = vmax.f32 %v2623, %v2751
        %v2816 = vmax.f32 %v2625, %v2752
        %v2817 = vmax.f32 %v2627, %v2753
        %v2818 = vmax.f32 %v2629, %v2754
        %v2819 = vmax.f32 %v2633, %v2755
        %v2820 = vmax.f32 %v2635, %v2756
        %v2821 = vmax.f32 %v2637, %v2757
        %v2822 = vmax.f32 %v2639, %v2758
        %v2823 = vmax.f32 %v2643, %v2759
        %v2824 = vmax.f32 %v2645, %v2760
        %v2825 = vmax.f32 %v2647, %v2761
        %v2826 = vmax.f32 %v2649, %v2762
        %v2827 = vmax.f32 %v2653, %v2763
        %v2828 = vmax.f32 %v2655, %v2764
        %v2829 = vmax.f32 %v2657, %v2765
        %v2830 = vmax.f32 %v2659, %v2766
        %v2831 = vmax.f32 %v2663, %v2767
        %v2832 = vmax.f32 %v2665, %v2768
        %v2833 = vmax.f32 %v2667, %v2769
        %v2834 = vmax.f32 %v2669, %v2770
        %v2835 = vmax.f32 %v2673, %v2771
        %v2836 = vmax.f32 %v2675, %v2772
        %v2837 = vmax.f32 %v2677, %v2773
        %v2838 = vmax.f32 %v2679, %v2774
        %v2839 = vmax.f32 %v2683, %v2775
        %v2840 = vmax.f32 %v2685, %v2776
        %v2841 = vmax.f32 %v2687, %v2777
        %v2842 = vmax.f32 %v2689, %v2778
        %v2843 = vmax.f32 %v2693, %v2779
        %v2844 = vmax.f32 %v2695, %v2780
        %v2845 = vmax.f32 %v2697, %v2781
        %v2846 = vmax.f32 %v2699, %v2782
        %v2847 = vmax.f32 %v2703, %v2783
        %v2848 = vmax.f32 %v2705, %v2784
        %v2849 = vmax.f32 %v2707, %v2785
        %v2850 = vmax.f32 %v2709, %v2786
        %v2851 = vmax.f32 %v2713, %v2787
        %v2852 = vmax.f32 %v2715, %v2788
        %v2853 = vmax.f32 %v2717, %v2789
        %v2854 = vmax.f32 %v2719, %v2790
        %v2855 = vmax.f32 %v2723, %v2791
        %v2856 = vmax.f32 %v2725, %v2792
        %v2857 = vmax.f32 %v2727, %v2793
        %v2858 = vmax.f32 %v2729, %v2794
        %v2859 = vpack.c.bf16 %v2797, %v2795
        %v2860 = vpack.c.bf16 %v2798, %v2796
        %v2861 = vpack.c.bf16 %v2801, %v2799
        %v2862 = vpack.c.bf16 %v2802, %v2800
        %v2863 = vpack.c.bf16 %v2805, %v2803
        %v2864 = vpack.c.bf16 %v2806, %v2804
        %v2865 = vpack.c.bf16 %v2809, %v2807
        %v2866 = vpack.c.bf16 %v2810, %v2808
        %v2867 = vpack.c.bf16 %v2813, %v2811
        %v2868 = vpack.c.bf16 %v2814, %v2812
        %v2869 = vpack.c.bf16 %v2817, %v2815
        %v2870 = vpack.c.bf16 %v2818, %v2816
        %v2871 = vpack.c.bf16 %v2821, %v2819
        %v2872 = vpack.c.bf16 %v2822, %v2820
        %v2873 = vpack.c.bf16 %v2825, %v2823
        %v2874 = vpack.c.bf16 %v2826, %v2824
        %v2875 = vpack.c.bf16 %v2829, %v2827
        %v2876 = vpack.c.bf16 %v2830, %v2828
        %v2877 = vpack.c.bf16 %v2833, %v2831
        %v2878 = vpack.c.bf16 %v2834, %v2832
        %v2879 = vpack.c.bf16 %v2837, %v2835
        %v2880 = vpack.c.bf16 %v2838, %v2836
        %v2881 = vpack.c.bf16 %v2841, %v2839
        %v2882 = vpack.c.bf16 %v2842, %v2840
        %v2883 = vpack.c.bf16 %v2845, %v2843
        %v2884 = vpack.c.bf16 %v2846, %v2844
        %v2885 = vpack.c.bf16 %v2849, %v2847
        %v2886 = vpack.c.bf16 %v2850, %v2848
        %v2887 = vpack.c.bf16 %v2853, %v2851
        %v2888 = vpack.c.bf16 %v2854, %v2852
        %v2889 = vpack.c.bf16 %v2857, %v2855
        %v2890 = vpack.c.bf16 %v2858, %v2856
        %v2891 = vld [vmem:[%s5] sm:$0xff]
        %v2892 = vld [vmem:[%s6] sm:$0xff]
        %2894 = vset.pattern.permute.xlu0 0
        %2895 = vperm.xlu0 %2894, %v2892
        %v2896 = vpop.permute.xlu0 %2895
        %v2899 = vunpack.c.l.b16 %v2891
        %v2900 = vunpack.c.h.b16 %v2891
        %v2901 = vpack.c.b16 %v2899, %v2899
        %v2902 = vpack.c.b16 %v2900, %v2900
        %2905 = vmatprep.subr.bf16.mxu0 %v2860
        %2906 = vmatpush1.bf16.msra.mxu0 %v2859
        %2907 = vmatprep.subr.bf16.mxu0 %v2862
        %2908 = vmatpush1.bf16.msra.mxu0 %v2861
        %2909 = vmatprep.subr.bf16.mxu0 %v2864
        %2910 = vmatpush1.bf16.msra.mxu0 %v2863
        %2911 = vmatprep.subr.bf16.mxu0 %v2866
        %2912 = vmatpush1.bf16.msra.mxu0 %v2865
        %2913 = vmatprep.subr.bf16.mxu0 %v2868
        %2914 = vmatpush1.bf16.msra.mxu0 %v2867
        %2915 = vmatprep.subr.bf16.mxu0 %v2870
        %2916 = vmatpush1.bf16.msra.mxu0 %v2869
        %2917 = vmatprep.subr.bf16.mxu0 %v2872
        %2918 = vmatpush1.bf16.msra.mxu0 %v2871
        %2919 = vmatprep.subr.bf16.mxu0 %v2874
        %2920 = vmatpush1.bf16.msra.mxu0 %v2873
        %2921 = vmatprep.subr.bf16.mxu0 %v2876
        %2922 = vmatpush1.bf16.msra.mxu0 %v2875
        %2923 = vmatprep.subr.bf16.mxu0 %v2878
        %2924 = vmatpush1.bf16.msra.mxu0 %v2877
        %2925 = vmatprep.subr.bf16.mxu0 %v2880
        %2926 = vmatpush1.bf16.msra.mxu0 %v2879
        %2927 = vmatprep.subr.bf16.mxu0 %v2882
        %2928 = vmatpush1.bf16.msra.mxu0 %v2881
        %2929 = vmatprep.subr.bf16.mxu0 %v2884
        %2930 = vmatpush1.bf16.msra.mxu0 %v2883
        %2931 = vmatprep.subr.bf16.mxu0 %v2886
        %2932 = vmatpush1.bf16.msra.mxu0 %v2885
        %2933 = vmatprep.subr.bf16.mxu0 %v2888
        %2934 = vmatpush1.bf16.msra.mxu0 %v2887
        %2935 = vmatprep.subr.bf16.mxu0 %v2890
        %2936 = vmatpush1.bf16.msra.mxu0 %v2889
        %2937 = vmatprep.mubr.bf16.mxu0 %v2902
        %2938 = vmatmul.mubr.bf16.gmra.mrb[0].mxu0 %v2901
        %v2939 = vpop.f32.mrb[0].mxu0
        %v2940 = vadd.f32 %v2896, %v2939
        %v2941 = vpop.f32.mrb[0].mxu0
        %v2942 = vadd.f32 %v2896, %v2941
        %v2943 = vpop.f32.mrb[0].mxu0
        %v2944 = vpop.f32.mrb[0].mxu0
        %2945 = vdwg.mxu0
        %v2948 = vcombine.low %v2940, %v2942
        %v2950 = vunpack.c.l.s4 1966171168
        %v2951 = vunpack.c.0.s8 %v2950
        %v2952 = vlaneseq
        %v2953 = vshrl.u32 %v2952, 7
        %v2954 = vsub.s32 %v2951, %v2953
        %v2955 = vrot.slane %v2948, %v2954
        %v2957 = vunpack.c.l.s4 1966171168
        %v2958 = vunpack.c.0.s8 %v2957
        %v2959 = vlaneseq
        %v2960 = vshrl.u32 %v2959, 7
        %v2961 = vsub.s32 %v2958, %v2960
        %v2962 = vrot.slane %v2955, %v2961
        %v2964 = vlaneseq
        %vm2965 = vcmp.ge.s32.totalorder %v2964, 0
        %vm2966 = vcmp.lt.s32.totalorder %v2964, 256
        %vm2967 = vmand %vm2965, %vm2966
        %2968 = vst.msk [vmem:[%s339] sm:$0x3] %vm2967, %v2962
        %s2969 = sand.u32 %s181, 1
        %s2970 = scalar_lea.sflag [#allocation4], %s2969
        %s2971 = sand.u32 %s181, 1
        %s2972 = smul.addr %s2971, 2
        %s2973 = scalar_lea.vmem [#allocation3], %s2972
        // Predicated region
        $region87: #{discriminator_forward.1} parent=81 // pred_check
          %p2974 = pneg %p191
        $region88: #{discriminator_forward.1} parent=81 // pred_check_branch
          %2976 = sbr.rel (%p2974) target = $region90
        $region89: #{discriminator_forward.1} parent=81 // pred_region
          %s2977 = smul.u32 2, %s21
          %s2979 = ssub.s32 32, 32
          %2980 = vsyncadd %s2970, %s2979
          %s2981 = smul.addr %s2977, 16
          %s2982 = scalar_lea.hbm %s7, %s2981
          %s2984 = sshll.u32 %s2973, 4
          %s2985 = int_to_ptr.vmem [resolvable:$true] %s2984
          %2987 = dma.vmem_to_hbm [thread:$0]  %s2985, 32, %s2982, %s2970
        $region90: #{discriminator_forward.1} parent=81 // pred_fallthru
          _
      $region82: #{discriminator_forward.1} parent=5 // pred_fallthru
        _
      %p2988 = scmp.le.s32.totalorder 2, %s16
      // Predicated region
      $region91: #{discriminator_forward.1} parent=5 // pred_check
        %p2989 = pneg %p2988
      $region92: #{discriminator_forward.1} parent=5 // pred_check_branch
        %2991 = sbr.rel (%p2989) target = $region94
      $region93: #{discriminator_forward.1} parent=5 // pred_region
        %s2992 = ssub.s32 %s16, 2
        // Predicated region
        $region95: #{discriminator_forward.1} parent=93 // pred_check
          %p2993 = pneg %p197
        $region96: #{discriminator_forward.1} parent=93 // pred_check_branch
          %2995 = sbr.rel (%p2993) target = $region98
        $region97: #{discriminator_forward.1} parent=93 // pred_region
          %s2996 = sand.u32 %s182, 1
          %s2997 = scalar_lea.sflag [#allocation4], %s2996
          %s2998 = sand.u32 %s182, 1
          %s2999 = smul.addr %s2998, 2
          %s3000 = scalar_lea.vmem [#allocation3], %s2999
          %3001 = dma.done %s2997, 32
        $region98: #{discriminator_forward.1} parent=93 // pred_fallthru
          _
      $region94: #{discriminator_forward.1} parent=5 // pred_fallthru
        _
    $region6: #{discriminator_forward.1} parent=1 // loop_footer
      %s20 = sadd.s32 1, %s16
    $region7: #{discriminator_forward.1} parent=1 // loop_footer_branch
      %15 = sbr.rel target = $region3
    $region8: #{discriminator_forward.1} parent=1 // loop_exit
      _
    %3002 = vsyncpa [#allocation4], 1
    %s3003 = scalar_lea.sflag [#allocation4], 1
    %3004 = vsyncpa %s3003, 1

</llo_original>
